<compile_context>
chip_gen: v7x
topology: tpu7x:2x2x1
jax: 0.10.0
libtpu: 0.0.40
codegen_flags: <defaults>
</compile_context>

<pallas_src>
import math
import jax
import jax.numpy as jnp
from jax import lax
from jax.experimental import pallas as pl
from jax.experimental.pallas import tpu as pltpu


def _gru_recurrence_kernel(gi_ref, whh_ref, bhn_ref, out_ref):
    """Whole-sequence GRU recurrence (PyTorch gate order r, z, n).

    gi_ref : (S, Bp, 3*Hp) precomputed input gates; b_ih and the r/z parts of
             b_hh are already folded in.  Gate g lives in lanes [g*Hp, g*Hp+Hp).
    whh_ref: (Hp, 3*Hp)   recurrent weights, transposed + zero-padded.
    bhn_ref: (1, Hp)      hidden bias of the n gate (must stay inside r*(...)).
    out_ref: (S, Bp, Hp)  per-step hidden states.
    """
    seq, bp, hp = out_ref.shape
    whh = whh_ref[...]                       # hoisted: read weights once
    bhn = bhn_ref[...]

    def step(t, h):
        gi = gi_ref[t]                                            # (Bp, 3*Hp)
        gh = jnp.dot(h, whh, preferred_element_type=jnp.float32)  # (Bp, 3*Hp)
        # Lane-aligned gate slices (multiples of 128).
        r = jax.nn.sigmoid(gi[:, 0:hp] + gh[:, 0:hp])
        z = jax.nn.sigmoid(gi[:, hp:2 * hp] + gh[:, hp:2 * hp])
        n = jnp.tanh(gi[:, 2 * hp:3 * hp] + r * (gh[:, 2 * hp:3 * hp] + bhn))
        h_new = (1.0 - z) * n + z * h
        out_ref[t] = h_new
        return h_new

    h0 = jnp.zeros((bp, hp), jnp.float32)    # PyTorch default: h0 = 0
    lax.fori_loop(0, seq, step, h0, unroll=True)


def encoder_forward(x, w_ih, w_hh, b_ih, b_hh):
    """Equivalent of Encoder.forward: x.view(S, B, -1) -> nn.GRU (1 layer)."""
    seq, batch = x.shape[0], x.shape[1]
    x_flat = x.reshape(seq, batch, -1).astype(jnp.float32)
    hidden = w_hh.shape[1]

    bp = ((batch + 7) // 8) * 8              # pad batch to 8 sublanes
    hp = ((hidden + 127) // 128) * 128       # pad each gate to 128 lanes

    w_ih = w_ih.astype(jnp.float32)
    w_hh = w_hh.astype(jnp.float32)
    b_ih = b_ih.astype(jnp.float32)
    b_hh = b_hh.astype(jnp.float32)

    # --- Hoisted input projection (one matmul, off the sequential path) ----
    # Fold b_ih and the r/z parts of b_hh; only b_hh_n must remain inside the
    # recurrence because n = tanh(i_n + r * (h @ W_hn + b_hn)).
    bias_fold = b_ih + jnp.concatenate(
        [b_hh[:2 * hidden], jnp.zeros((hidden,), jnp.float32)])
    gi = jnp.einsum("sbi,gi->sbg", x_flat, w_ih) + bias_fold      # (S, B, 3H)

    # --- Pad to (8, 128)-aligned, gate-major layout ------------------------
    gi = gi.reshape(seq, batch, 3, hidden)
    gi = jnp.pad(gi, ((0, 0), (0, bp - batch), (0, 0), (0, hp - hidden)))
    gi = gi.reshape(seq, bp, 3 * hp)

    whh_t = w_hh.T.reshape(hidden, 3, hidden)                     # (H, 3, H)
    whh_t = jnp.pad(whh_t, ((0, hp - hidden), (0, 0), (0, hp - hidden)))
    whh_t = whh_t.reshape(hp, 3 * hp)                             # (Hp, 3*Hp)

    bhn = jnp.pad(b_hh[2 * hidden:], (0, hp - hidden)).reshape(1, hp)

    out_p = pl.pallas_call(
        _gru_recurrence_kernel,
        out_shape=jax.ShapeDtypeStruct((seq, bp, hp), jnp.float32),
        grid_spec=pltpu.PrefetchScalarGridSpec(
            num_scalar_prefetch=0,
            grid=(1,),                       # single invocation; loop in-kernel
            in_specs=[
                pl.BlockSpec((seq, bp, 3 * hp), lambda i: (0, 0, 0)),
                pl.BlockSpec((hp, 3 * hp), lambda i: (0, 0)),
                pl.BlockSpec((1, hp), lambda i: (0, 0)),
            ],
            out_specs=pl.BlockSpec((seq, bp, hp), lambda i: (0, 0, 0)),
        ),
        compiler_params=pltpu.CompilerParams(
            dimension_semantics=("arbitrary",)),
    )(gi, whh_t, bhn)

    output = out_p[:, :batch, :hidden]       # strip padding
    h_n = output[-1][None]                   # num_layers == 1 -> (1, B, H)
    return output, h_n


def gru_reference(x_flat, w_ih, w_hh, b_ih, b_hh):
    """Pure-JAX reference matching torch.nn.GRU (1 layer, h0 = 0)."""
    H = w_hh.shape[1]
    batch = x_flat.shape[1]

    def step(h, x_t):
        gi = x_t @ w_ih.T + b_ih
        gh = h @ w_hh.T + b_hh
        i_r, i_z, i_n = gi[:, :H], gi[:, H:2 * H], gi[:, 2 * H:]
        h_r, h_z, h_n = gh[:, :H], gh[:, H:2 * H], gh[:, 2 * H:]
        r = jax.nn.sigmoid(i_r + h_r)
        z = jax.nn.sigmoid(i_z + h_z)
        n = jnp.tanh(i_n + r * h_n)
        h_new = (1.0 - z) * n + z * h
        return h_new, h_new

    h0 = jnp.zeros((batch, H), jnp.float32)
    h_last, outs = lax.scan(step, h0, x_flat)
    return outs, h_last[None]


if __name__ == "__main__":
    # Small shapes consistent with Encoder: x (seq=8, batch=4, C=4, W=4)
    # -> view to (8, 4, 16); input_size=16, hidden_size=32, num_layers=1.
    seq, batch, C, W = 8, 4, 4, 4
    input_size = C * W
    hidden_size = 32

    key = jax.random.PRNGKey(0)
    kx, k1, k2, k3, k4 = jax.random.split(key, 5)
    x = jax.random.normal(kx, (seq, batch, C, W), jnp.float32)

    # Deterministic param init (PyTorch-style U(-1/sqrt(H), 1/sqrt(H))).
    bound = 1.0 / math.sqrt(hidden_size)
    w_ih = jax.random.uniform(k1, (3 * hidden_size, input_size), jnp.float32,
                              -bound, bound)
    w_hh = jax.random.uniform(k2, (3 * hidden_size, hidden_size), jnp.float32,
                              -bound, bound)
    b_ih = jax.random.uniform(k3, (3 * hidden_size,), jnp.float32, -bound, bound)
    b_hh = jax.random.uniform(k4, (3 * hidden_size,), jnp.float32, -bound, bound)

    output, h_n = encoder_forward(x, w_ih, w_hh, b_ih, b_hh)
    output = jax.block_until_ready(output)
    h_n = jax.block_until_ready(h_n)

    # Correctness check against a pure-JAX GRU reference.
    ref_out, ref_hn = gru_reference(x.reshape(seq, batch, -1), w_ih, w_hh,
                                    b_ih, b_hh)
    assert output.shape == (seq, batch, hidden_size)
    assert h_n.shape == (1, batch, hidden_size)
    assert jnp.allclose(output, ref_out, atol=1e-4, rtol=1e-4)
    assert jnp.allclose(h_n, ref_hn, atol=1e-4, rtol=1e-4)

    print("KERNEL_OK")
</pallas_src>

<mosaic_0001>
module attributes {stable_mosaic.version = 11 : i64} {
  func.func @_gru_recurrence_kernel(%arg0: i32, %arg1: memref<8x8x384xf32, #tpu.memory_space<vmem>>, %arg2: memref<128x384xf32, #tpu.memory_space<vmem>>, %arg3: memref<1x128xf32, #tpu.memory_space<vmem>>, %arg4: memref<8x8x128xf32, #tpu.memory_space<vmem>>) attributes {dimension_semantics = [#tpu.dimension_semantics<arbitrary>], iteration_bounds = array<i64: 1>, scalar_prefetch = 0 : i64, scratch_operands = 0 : i64, tpu.core_type = #tpu.core_type<tc>, window_params = [{pipeline_mode = #tpu.pipeline_mode<synchronous>, transform_indices = @transform_0, window_bounds = array<i64: 8, 8, 384>}, {pipeline_mode = #tpu.pipeline_mode<synchronous>, transform_indices = @transform_1, window_bounds = array<i64: 128, 384>}, {pipeline_mode = #tpu.pipeline_mode<synchronous>, transform_indices = @transform_2, window_bounds = array<i64: 1, 128>}, {pipeline_mode = #tpu.pipeline_mode<synchronous>, transform_indices = @transform_3, window_bounds = array<i64: 8, 8, 128>}]} {
    %c0 = arith.constant 0 : index
    %c0_0 = arith.constant 0 : index
    %0 = vector.load %arg2[%c0, %c0_0] : memref<128x384xf32, #tpu.memory_space<vmem>>, vector<128x384xf32>
    %c0_1 = arith.constant 0 : index
    %c0_2 = arith.constant 0 : index
    %1 = vector.load %arg3[%c0_1, %c0_2] : memref<1x128xf32, #tpu.memory_space<vmem>>, vector<1x128xf32>
    %cst = arith.constant 0.000000e+00 : f32
    %2 = vector.broadcast %cst : f32 to vector<8x128xf32>
    %c0_i32 = arith.constant 0 : i32
    %3 = arith.index_cast %c0_i32 : i32 to index
    %c0_3 = arith.constant 0 : index
    %c0_4 = arith.constant 0 : index
    %4 = vector.load %arg1[%3, %c0_3, %c0_4] : memref<8x8x384xf32, #tpu.memory_space<vmem>>, vector<1x8x384xf32>
    %5 = vector.shape_cast %4 : vector<1x8x384xf32> to vector<8x384xf32>
    %cst_5 = arith.constant dense<0.000000e+00> : vector<8x384xf32>
    %6 = tpu.matmul %2, %0, %cst_5 {dimension_numbers = #tpu.dot_dimension_numbers<[1], [0], [0], [1], [0, 0, 1, 1], [], []>} : vector<8x128xf32>, vector<128x384xf32>, vector<8x384xf32> -> vector<8x384xf32>
    %7 = vector.extract_strided_slice %5 {offsets = [0, 0], sizes = [8, 128], strides = [1, 1]} : vector<8x384xf32> to vector<8x128xf32>
    %8 = vector.extract_strided_slice %6 {offsets = [0, 0], sizes = [8, 128], strides = [1, 1]} : vector<8x384xf32> to vector<8x128xf32>
    %9 = arith.addf %7, %8 : vector<8x128xf32>
    %10 = arith.negf %9 : vector<8x128xf32>
    %11 = math.exp %10 : vector<8x128xf32>
    %cst_6 = arith.constant 1.000000e+00 : f32
    %12 = vector.broadcast %cst_6 : f32 to vector<8x128xf32>
    %13 = arith.addf %12, %11 : vector<8x128xf32>
    %14 = arith.divf %12, %13 : vector<8x128xf32>
    %15 = vector.extract_strided_slice %5 {offsets = [0, 128], sizes = [8, 128], strides = [1, 1]} : vector<8x384xf32> to vector<8x128xf32>
    %16 = vector.extract_strided_slice %6 {offsets = [0, 128], sizes = [8, 128], strides = [1, 1]} : vector<8x384xf32> to vector<8x128xf32>
    %17 = arith.addf %15, %16 : vector<8x128xf32>
    %18 = arith.negf %17 : vector<8x128xf32>
    %19 = math.exp %18 : vector<8x128xf32>
    %cst_7 = arith.constant 1.000000e+00 : f32
    %20 = vector.broadcast %cst_7 : f32 to vector<8x128xf32>
    %21 = arith.addf %20, %19 : vector<8x128xf32>
    %22 = arith.divf %20, %21 : vector<8x128xf32>
    %23 = vector.extract_strided_slice %5 {offsets = [0, 256], sizes = [8, 128], strides = [1, 1]} : vector<8x384xf32> to vector<8x128xf32>
    %24 = vector.extract_strided_slice %6 {offsets = [0, 256], sizes = [8, 128], strides = [1, 1]} : vector<8x384xf32> to vector<8x128xf32>
    %25 = vector.broadcast %1 : vector<1x128xf32> to vector<8x128xf32>
    %26 = arith.addf %24, %25 : vector<8x128xf32>
    %27 = arith.mulf %14, %26 : vector<8x128xf32>
    %28 = arith.addf %23, %27 : vector<8x128xf32>
    %29 = math.tanh %28 : vector<8x128xf32>
    %cst_8 = arith.constant 1.000000e+00 : f32
    %30 = vector.broadcast %cst_8 : f32 to vector<8x128xf32>
    %31 = arith.subf %30, %22 : vector<8x128xf32>
    %32 = arith.mulf %31, %29 : vector<8x128xf32>
    %33 = arith.mulf %22, %2 : vector<8x128xf32>
    %34 = arith.addf %32, %33 : vector<8x128xf32>
    %35 = arith.index_cast %c0_i32 : i32 to index
    %c0_9 = arith.constant 0 : index
    %c0_10 = arith.constant 0 : index
    %36 = vector.load %arg4[%35, %c0_9, %c0_10] : memref<8x8x128xf32, #tpu.memory_space<vmem>>, vector<1x8x128xf32>
    %37 = vector.shape_cast %36 : vector<1x8x128xf32> to vector<8x128xf32>
    %38 = vector.shape_cast %34 : vector<8x128xf32> to vector<1x8x128xf32>
    tpu.vector_store %arg4[%35, %c0_9, %c0_10], %38 {strides = array<i32>} : memref<8x8x128xf32, #tpu.memory_space<vmem>>, vector<1x8x128xf32>,
    %c1_i32 = arith.constant 1 : i32
    %39 = arith.index_cast %c1_i32 : i32 to index
    %c0_11 = arith.constant 0 : index
    %c0_12 = arith.constant 0 : index
    %40 = vector.load %arg1[%39, %c0_11, %c0_12] : memref<8x8x384xf32, #tpu.memory_space<vmem>>, vector<1x8x384xf32>
    %41 = vector.shape_cast %40 : vector<1x8x384xf32> to vector<8x384xf32>
    %cst_13 = arith.constant dense<0.000000e+00> : vector<8x384xf32>
    %42 = tpu.matmul %34, %0, %cst_13 {dimension_numbers = #tpu.dot_dimension_numbers<[1], [0], [0], [1], [0, 0, 1, 1], [], []>} : vector<8x128xf32>, vector<128x384xf32>, vector<8x384xf32> -> vector<8x384xf32>
    %43 = vector.extract_strided_slice %41 {offsets = [0, 0], sizes = [8, 128], strides = [1, 1]} : vector<8x384xf32> to vector<8x128xf32>
    %44 = vector.extract_strided_slice %42 {offsets = [0, 0], sizes = [8, 128], strides = [1, 1]} : vector<8x384xf32> to vector<8x128xf32>
    %45 = arith.addf %43, %44 : vector<8x128xf32>
    %46 = arith.negf %45 : vector<8x128xf32>
    %47 = math.exp %46 : vector<8x128xf32>
    %cst_14 = arith.constant 1.000000e+00 : f32
    %48 = vector.broadcast %cst_14 : f32 to vector<8x128xf32>
    %49 = arith.addf %48, %47 : vector<8x128xf32>
    %50 = arith.divf %48, %49 : vector<8x128xf32>
    %51 = vector.extract_strided_slice %41 {offsets = [0, 128], sizes = [8, 128], strides = [1, 1]} : vector<8x384xf32> to vector<8x128xf32>
    %52 = vector.extract_strided_slice %42 {offsets = [0, 128], sizes = [8, 128], strides = [1, 1]} : vector<8x384xf32> to vector<8x128xf32>
    %53 = arith.addf %51, %52 : vector<8x128xf32>
    %54 = arith.negf %53 : vector<8x128xf32>
    %55 = math.exp %54 : vector<8x128xf32>
    %cst_15 = arith.constant 1.000000e+00 : f32
    %56 = vector.broadcast %cst_15 : f32 to vector<8x128xf32>
    %57 = arith.addf %56, %55 : vector<8x128xf32>
    %58 = arith.divf %56, %57 : vector<8x128xf32>
    %59 = vector.extract_strided_slice %41 {offsets = [0, 256], sizes = [8, 128], strides = [1, 1]} : vector<8x384xf32> to vector<8x128xf32>
    %60 = vector.extract_strided_slice %42 {offsets = [0, 256], sizes = [8, 128], strides = [1, 1]} : vector<8x384xf32> to vector<8x128xf32>
    %61 = vector.broadcast %1 : vector<1x128xf32> to vector<8x128xf32>
    %62 = arith.addf %60, %61 : vector<8x128xf32>
    %63 = arith.mulf %50, %62 : vector<8x128xf32>
    %64 = arith.addf %59, %63 : vector<8x128xf32>
    %65 = math.tanh %64 : vector<8x128xf32>
    %cst_16 = arith.constant 1.000000e+00 : f32
    %66 = vector.broadcast %cst_16 : f32 to vector<8x128xf32>
    %67 = arith.subf %66, %58 : vector<8x128xf32>
    %68 = arith.mulf %67, %65 : vector<8x128xf32>
    %69 = arith.mulf %58, %34 : vector<8x128xf32>
    %70 = arith.addf %68, %69 : vector<8x128xf32>
    %71 = arith.index_cast %c1_i32 : i32 to index
    %c0_17 = arith.constant 0 : index
    %c0_18 = arith.constant 0 : index
    %72 = vector.load %arg4[%71, %c0_17, %c0_18] : memref<8x8x128xf32, #tpu.memory_space<vmem>>, vector<1x8x128xf32>
    %73 = vector.shape_cast %72 : vector<1x8x128xf32> to vector<8x128xf32>
    %74 = vector.shape_cast %70 : vector<8x128xf32> to vector<1x8x128xf32>
    tpu.vector_store %arg4[%71, %c0_17, %c0_18], %74 {strides = array<i32>} : memref<8x8x128xf32, #tpu.memory_space<vmem>>, vector<1x8x128xf32>,
    %c2_i32 = arith.constant 2 : i32
    %75 = arith.index_cast %c2_i32 : i32 to index
    %c0_19 = arith.constant 0 : index
    %c0_20 = arith.constant 0 : index
    %76 = vector.load %arg1[%75, %c0_19, %c0_20] : memref<8x8x384xf32, #tpu.memory_space<vmem>>, vector<1x8x384xf32>
    %77 = vector.shape_cast %76 : vector<1x8x384xf32> to vector<8x384xf32>
    %cst_21 = arith.constant dense<0.000000e+00> : vector<8x384xf32>
    %78 = tpu.matmul %70, %0, %cst_21 {dimension_numbers = #tpu.dot_dimension_numbers<[1], [0], [0], [1], [0, 0, 1, 1], [], []>} : vector<8x128xf32>, vector<128x384xf32>, vector<8x384xf32> -> vector<8x384xf32>
    %79 = vector.extract_strided_slice %77 {offsets = [0, 0], sizes = [8, 128], strides = [1, 1]} : vector<8x384xf32> to vector<8x128xf32>
    %80 = vector.extract_strided_slice %78 {offsets = [0, 0], sizes = [8, 128], strides = [1, 1]} : vector<8x384xf32> to vector<8x128xf32>
    %81 = arith.addf %79, %80 : vector<8x128xf32>
    %82 = arith.negf %81 : vector<8x128xf32>
    %83 = math.exp %82 : vector<8x128xf32>
    %cst_22 = arith.constant 1.000000e+00 : f32
    %84 = vector.broadcast %cst_22 : f32 to vector<8x128xf32>
    %85 = arith.addf %84, %83 : vector<8x128xf32>
    %86 = arith.divf %84, %85 : vector<8x128xf32>
    %87 = vector.extract_strided_slice %77 {offsets = [0, 128], sizes = [8, 128], strides = [1, 1]} : vector<8x384xf32> to vector<8x128xf32>
    %88 = vector.extract_strided_slice %78 {offsets = [0, 128], sizes = [8, 128], strides = [1, 1]} : vector<8x384xf32> to vector<8x128xf32>
    %89 = arith.addf %87, %88 : vector<8x128xf32>
    %90 = arith.negf %89 : vector<8x128xf32>
    %91 = math.exp %90 : vector<8x128xf32>
    %cst_23 = arith.constant 1.000000e+00 : f32
    %92 = vector.broadcast %cst_23 : f32 to vector<8x128xf32>
    %93 = arith.addf %92, %91 : vector<8x128xf32>
    %94 = arith.divf %92, %93 : vector<8x128xf32>
    %95 = vector.extract_strided_slice %77 {offsets = [0, 256], sizes = [8, 128], strides = [1, 1]} : vector<8x384xf32> to vector<8x128xf32>
    %96 = vector.extract_strided_slice %78 {offsets = [0, 256], sizes = [8, 128], strides = [1, 1]} : vector<8x384xf32> to vector<8x128xf32>
    %97 = vector.broadcast %1 : vector<1x128xf32> to vector<8x128xf32>
    %98 = arith.addf %96, %97 : vector<8x128xf32>
    %99 = arith.mulf %86, %98 : vector<8x128xf32>
    %100 = arith.addf %95, %99 : vector<8x128xf32>
    %101 = math.tanh %100 : vector<8x128xf32>
    %cst_24 = arith.constant 1.000000e+00 : f32
    %102 = vector.broadcast %cst_24 : f32 to vector<8x128xf32>
    %103 = arith.subf %102, %94 : vector<8x128xf32>
    %104 = arith.mulf %103, %101 : vector<8x128xf32>
    %105 = arith.mulf %94, %70 : vector<8x128xf32>
    %106 = arith.addf %104, %105 : vector<8x128xf32>
    %107 = arith.index_cast %c2_i32 : i32 to index
    %c0_25 = arith.constant 0 : index
    %c0_26 = arith.constant 0 : index
    %108 = vector.load %arg4[%107, %c0_25, %c0_26] : memref<8x8x128xf32, #tpu.memory_space<vmem>>, vector<1x8x128xf32>
    %109 = vector.shape_cast %108 : vector<1x8x128xf32> to vector<8x128xf32>
    %110 = vector.shape_cast %106 : vector<8x128xf32> to vector<1x8x128xf32>
    tpu.vector_store %arg4[%107, %c0_25, %c0_26], %110 {strides = array<i32>} : memref<8x8x128xf32, #tpu.memory_space<vmem>>, vector<1x8x128xf32>,
    %c3_i32 = arith.constant 3 : i32
    %111 = arith.index_cast %c3_i32 : i32 to index
    %c0_27 = arith.constant 0 : index
    %c0_28 = arith.constant 0 : index
    %112 = vector.load %arg1[%111, %c0_27, %c0_28] : memref<8x8x384xf32, #tpu.memory_space<vmem>>, vector<1x8x384xf32>
    %113 = vector.shape_cast %112 : vector<1x8x384xf32> to vector<8x384xf32>
    %cst_29 = arith.constant dense<0.000000e+00> : vector<8x384xf32>
    %114 = tpu.matmul %106, %0, %cst_29 {dimension_numbers = #tpu.dot_dimension_numbers<[1], [0], [0], [1], [0, 0, 1, 1], [], []>} : vector<8x128xf32>, vector<128x384xf32>, vector<8x384xf32> -> vector<8x384xf32>
    %115 = vector.extract_strided_slice %113 {offsets = [0, 0], sizes = [8, 128], strides = [1, 1]} : vector<8x384xf32> to vector<8x128xf32>
    %116 = vector.extract_strided_slice %114 {offsets = [0, 0], sizes = [8, 128], strides = [1, 1]} : vector<8x384xf32> to vector<8x128xf32>
    %117 = arith.addf %115, %116 : vector<8x128xf32>
    %118 = arith.negf %117 : vector<8x128xf32>
    %119 = math.exp %118 : vector<8x128xf32>
    %cst_30 = arith.constant 1.000000e+00 : f32
    %120 = vector.broadcast %cst_30 : f32 to vector<8x128xf32>
    %121 = arith.addf %120, %119 : vector<8x128xf32>
    %122 = arith.divf %120, %121 : vector<8x128xf32>
    %123 = vector.extract_strided_slice %113 {offsets = [0, 128], sizes = [8, 128], strides = [1, 1]} : vector<8x384xf32> to vector<8x128xf32>
    %124 = vector.extract_strided_slice %114 {offsets = [0, 128], sizes = [8, 128], strides = [1, 1]} : vector<8x384xf32> to vector<8x128xf32>
    %125 = arith.addf %123, %124 : vector<8x128xf32>
    %126 = arith.negf %125 : vector<8x128xf32>
    %127 = math.exp %126 : vector<8x128xf32>
    %cst_31 = arith.constant 1.000000e+00 : f32
    %128 = vector.broadcast %cst_31 : f32 to vector<8x128xf32>
    %129 = arith.addf %128, %127 : vector<8x128xf32>
    %130 = arith.divf %128, %129 : vector<8x128xf32>
    %131 = vector.extract_strided_slice %113 {offsets = [0, 256], sizes = [8, 128], strides = [1, 1]} : vector<8x384xf32> to vector<8x128xf32>
    %132 = vector.extract_strided_slice %114 {offsets = [0, 256], sizes = [8, 128], strides = [1, 1]} : vector<8x384xf32> to vector<8x128xf32>
    %133 = vector.broadcast %1 : vector<1x128xf32> to vector<8x128xf32>
    %134 = arith.addf %132, %133 : vector<8x128xf32>
    %135 = arith.mulf %122, %134 : vector<8x128xf32>
    %136 = arith.addf %131, %135 : vector<8x128xf32>
    %137 = math.tanh %136 : vector<8x128xf32>
    %cst_32 = arith.constant 1.000000e+00 : f32
    %138 = vector.broadcast %cst_32 : f32 to vector<8x128xf32>
    %139 = arith.subf %138, %130 : vector<8x128xf32>
    %140 = arith.mulf %139, %137 : vector<8x128xf32>
    %141 = arith.mulf %130, %106 : vector<8x128xf32>
    %142 = arith.addf %140, %141 : vector<8x128xf32>
    %143 = arith.index_cast %c3_i32 : i32 to index
    %c0_33 = arith.constant 0 : index
    %c0_34 = arith.constant 0 : index
    %144 = vector.load %arg4[%143, %c0_33, %c0_34] : memref<8x8x128xf32, #tpu.memory_space<vmem>>, vector<1x8x128xf32>
    %145 = vector.shape_cast %144 : vector<1x8x128xf32> to vector<8x128xf32>
    %146 = vector.shape_cast %142 : vector<8x128xf32> to vector<1x8x128xf32>
    tpu.vector_store %arg4[%143, %c0_33, %c0_34], %146 {strides = array<i32>} : memref<8x8x128xf32, #tpu.memory_space<vmem>>, vector<1x8x128xf32>,
    %c4_i32 = arith.constant 4 : i32
    %147 = arith.index_cast %c4_i32 : i32 to index
    %c0_35 = arith.constant 0 : index
    %c0_36 = arith.constant 0 : index
    %148 = vector.load %arg1[%147, %c0_35, %c0_36] : memref<8x8x384xf32, #tpu.memory_space<vmem>>, vector<1x8x384xf32>
    %149 = vector.shape_cast %148 : vector<1x8x384xf32> to vector<8x384xf32>
    %cst_37 = arith.constant dense<0.000000e+00> : vector<8x384xf32>
    %150 = tpu.matmul %142, %0, %cst_37 {dimension_numbers = #tpu.dot_dimension_numbers<[1], [0], [0], [1], [0, 0, 1, 1], [], []>} : vector<8x128xf32>, vector<128x384xf32>, vector<8x384xf32> -> vector<8x384xf32>
    %151 = vector.extract_strided_slice %149 {offsets = [0, 0], sizes = [8, 128], strides = [1, 1]} : vector<8x384xf32> to vector<8x128xf32>
    %152 = vector.extract_strided_slice %150 {offsets = [0, 0], sizes = [8, 128], strides = [1, 1]} : vector<8x384xf32> to vector<8x128xf32>
    %153 = arith.addf %151, %152 : vector<8x128xf32>
    %154 = arith.negf %153 : vector<8x128xf32>
    %155 = math.exp %154 : vector<8x128xf32>
    %cst_38 = arith.constant 1.000000e+00 : f32
    %156 = vector.broadcast %cst_38 : f32 to vector<8x128xf32>
    %157 = arith.addf %156, %155 : vector<8x128xf32>
    %158 = arith.divf %156, %157 : vector<8x128xf32>
    %159 = vector.extract_strided_slice %149 {offsets = [0, 128], sizes = [8, 128], strides = [1, 1]} : vector<8x384xf32> to vector<8x128xf32>
    %160 = vector.extract_strided_slice %150 {offsets = [0, 128], sizes = [8, 128], strides = [1, 1]} : vector<8x384xf32> to vector<8x128xf32>
    %161 = arith.addf %159, %160 : vector<8x128xf32>
    %162 = arith.negf %161 : vector<8x128xf32>
    %163 = math.exp %162 : vector<8x128xf32>
    %cst_39 = arith.constant 1.000000e+00 : f32
    %164 = vector.broadcast %cst_39 : f32 to vector<8x128xf32>
    %165 = arith.addf %164, %163 : vector<8x128xf32>
    %166 = arith.divf %164, %165 : vector<8x128xf32>
    %167 = vector.extract_strided_slice %149 {offsets = [0, 256], sizes = [8, 128], strides = [1, 1]} : vector<8x384xf32> to vector<8x128xf32>
    %168 = vector.extract_strided_slice %150 {offsets = [0, 256], sizes = [8, 128], strides = [1, 1]} : vector<8x384xf32> to vector<8x128xf32>
    %169 = vector.broadcast %1 : vector<1x128xf32> to vector<8x128xf32>
    %170 = arith.addf %168, %169 : vector<8x128xf32>
    %171 = arith.mulf %158, %170 : vector<8x128xf32>
    %172 = arith.addf %167, %171 : vector<8x128xf32>
    %173 = math.tanh %172 : vector<8x128xf32>
    %cst_40 = arith.constant 1.000000e+00 : f32
    %174 = vector.broadcast %cst_40 : f32 to vector<8x128xf32>
    %175 = arith.subf %174, %166 : vector<8x128xf32>
    %176 = arith.mulf %175, %173 : vector<8x128xf32>
    %177 = arith.mulf %166, %142 : vector<8x128xf32>
    %178 = arith.addf %176, %177 : vector<8x128xf32>
    %179 = arith.index_cast %c4_i32 : i32 to index
    %c0_41 = arith.constant 0 : index
    %c0_42 = arith.constant 0 : index
    %180 = vector.load %arg4[%179, %c0_41, %c0_42] : memref<8x8x128xf32, #tpu.memory_space<vmem>>, vector<1x8x128xf32>
    %181 = vector.shape_cast %180 : vector<1x8x128xf32> to vector<8x128xf32>
    %182 = vector.shape_cast %178 : vector<8x128xf32> to vector<1x8x128xf32>
    tpu.vector_store %arg4[%179, %c0_41, %c0_42], %182 {strides = array<i32>} : memref<8x8x128xf32, #tpu.memory_space<vmem>>, vector<1x8x128xf32>,
    %c5_i32 = arith.constant 5 : i32
    %183 = arith.index_cast %c5_i32 : i32 to index
    %c0_43 = arith.constant 0 : index
    %c0_44 = arith.constant 0 : index
    %184 = vector.load %arg1[%183, %c0_43, %c0_44] : memref<8x8x384xf32, #tpu.memory_space<vmem>>, vector<1x8x384xf32>
    %185 = vector.shape_cast %184 : vector<1x8x384xf32> to vector<8x384xf32>
    %cst_45 = arith.constant dense<0.000000e+00> : vector<8x384xf32>
    %186 = tpu.matmul %178, %0, %cst_45 {dimension_numbers = #tpu.dot_dimension_numbers<[1], [0], [0], [1], [0, 0, 1, 1], [], []>} : vector<8x128xf32>, vector<128x384xf32>, vector<8x384xf32> -> vector<8x384xf32>
    %187 = vector.extract_strided_slice %185 {offsets = [0, 0], sizes = [8, 128], strides = [1, 1]} : vector<8x384xf32> to vector<8x128xf32>
    %188 = vector.extract_strided_slice %186 {offsets = [0, 0], sizes = [8, 128], strides = [1, 1]} : vector<8x384xf32> to vector<8x128xf32>
    %189 = arith.addf %187, %188 : vector<8x128xf32>
    %190 = arith.negf %189 : vector<8x128xf32>
    %191 = math.exp %190 : vector<8x128xf32>
    %cst_46 = arith.constant 1.000000e+00 : f32
    %192 = vector.broadcast %cst_46 : f32 to vector<8x128xf32>
    %193 = arith.addf %192, %191 : vector<8x128xf32>
    %194 = arith.divf %192, %193 : vector<8x128xf32>
    %195 = vector.extract_strided_slice %185 {offsets = [0, 128], sizes = [8, 128], strides = [1, 1]} : vector<8x384xf32> to vector<8x128xf32>
    %196 = vector.extract_strided_slice %186 {offsets = [0, 128], sizes = [8, 128], strides = [1, 1]} : vector<8x384xf32> to vector<8x128xf32>
    %197 = arith.addf %195, %196 : vector<8x128xf32>
    %198 = arith.negf %197 : vector<8x128xf32>
    %199 = math.exp %198 : vector<8x128xf32>
    %cst_47 = arith.constant 1.000000e+00 : f32
    %200 = vector.broadcast %cst_47 : f32 to vector<8x128xf32>
    %201 = arith.addf %200, %199 : vector<8x128xf32>
    %202 = arith.divf %200, %201 : vector<8x128xf32>
    %203 = vector.extract_strided_slice %185 {offsets = [0, 256], sizes = [8, 128], strides = [1, 1]} : vector<8x384xf32> to vector<8x128xf32>
    %204 = vector.extract_strided_slice %186 {offsets = [0, 256], sizes = [8, 128], strides = [1, 1]} : vector<8x384xf32> to vector<8x128xf32>
    %205 = vector.broadcast %1 : vector<1x128xf32> to vector<8x128xf32>
    %206 = arith.addf %204, %205 : vector<8x128xf32>
    %207 = arith.mulf %194, %206 : vector<8x128xf32>
    %208 = arith.addf %203, %207 : vector<8x128xf32>
    %209 = math.tanh %208 : vector<8x128xf32>
    %cst_48 = arith.constant 1.000000e+00 : f32
    %210 = vector.broadcast %cst_48 : f32 to vector<8x128xf32>
    %211 = arith.subf %210, %202 : vector<8x128xf32>
    %212 = arith.mulf %211, %209 : vector<8x128xf32>
    %213 = arith.mulf %202, %178 : vector<8x128xf32>
    %214 = arith.addf %212, %213 : vector<8x128xf32>
    %215 = arith.index_cast %c5_i32 : i32 to index
    %c0_49 = arith.constant 0 : index
    %c0_50 = arith.constant 0 : index
    %216 = vector.load %arg4[%215, %c0_49, %c0_50] : memref<8x8x128xf32, #tpu.memory_space<vmem>>, vector<1x8x128xf32>
    %217 = vector.shape_cast %216 : vector<1x8x128xf32> to vector<8x128xf32>
    %218 = vector.shape_cast %214 : vector<8x128xf32> to vector<1x8x128xf32>
    tpu.vector_store %arg4[%215, %c0_49, %c0_50], %218 {strides = array<i32>} : memref<8x8x128xf32, #tpu.memory_space<vmem>>, vector<1x8x128xf32>,
    %c6_i32 = arith.constant 6 : i32
    %219 = arith.index_cast %c6_i32 : i32 to index
    %c0_51 = arith.constant 0 : index
    %c0_52 = arith.constant 0 : index
    %220 = vector.load %arg1[%219, %c0_51, %c0_52] : memref<8x8x384xf32, #tpu.memory_space<vmem>>, vector<1x8x384xf32>
    %221 = vector.shape_cast %220 : vector<1x8x384xf32> to vector<8x384xf32>
    %cst_53 = arith.constant dense<0.000000e+00> : vector<8x384xf32>
    %222 = tpu.matmul %214, %0, %cst_53 {dimension_numbers = #tpu.dot_dimension_numbers<[1], [0], [0], [1], [0, 0, 1, 1], [], []>} : vector<8x128xf32>, vector<128x384xf32>, vector<8x384xf32> -> vector<8x384xf32>
    %223 = vector.extract_strided_slice %221 {offsets = [0, 0], sizes = [8, 128], strides = [1, 1]} : vector<8x384xf32> to vector<8x128xf32>
    %224 = vector.extract_strided_slice %222 {offsets = [0, 0], sizes = [8, 128], strides = [1, 1]} : vector<8x384xf32> to vector<8x128xf32>
    %225 = arith.addf %223, %224 : vector<8x128xf32>
    %226 = arith.negf %225 : vector<8x128xf32>
    %227 = math.exp %226 : vector<8x128xf32>
    %cst_54 = arith.constant 1.000000e+00 : f32
    %228 = vector.broadcast %cst_54 : f32 to vector<8x128xf32>
    %229 = arith.addf %228, %227 : vector<8x128xf32>
    %230 = arith.divf %228, %229 : vector<8x128xf32>
    %231 = vector.extract_strided_slice %221 {offsets = [0, 128], sizes = [8, 128], strides = [1, 1]} : vector<8x384xf32> to vector<8x128xf32>
    %232 = vector.extract_strided_slice %222 {offsets = [0, 128], sizes = [8, 128], strides = [1, 1]} : vector<8x384xf32> to vector<8x128xf32>
    %233 = arith.addf %231, %232 : vector<8x128xf32>
    %234 = arith.negf %233 : vector<8x128xf32>
    %235 = math.exp %234 : vector<8x128xf32>
    %cst_55 = arith.constant 1.000000e+00 : f32
    %236 = vector.broadcast %cst_55 : f32 to vector<8x128xf32>
    %237 = arith.addf %236, %235 : vector<8x128xf32>
    %238 = arith.divf %236, %237 : vector<8x128xf32>
    %239 = vector.extract_strided_slice %221 {offsets = [0, 256], sizes = [8, 128], strides = [1, 1]} : vector<8x384xf32> to vector<8x128xf32>
    %240 = vector.extract_strided_slice %222 {offsets = [0, 256], sizes = [8, 128], strides = [1, 1]} : vector<8x384xf32> to vector<8x128xf32>
    %241 = vector.broadcast %1 : vector<1x128xf32> to vector<8x128xf32>
    %242 = arith.addf %240, %241 : vector<8x128xf32>
    %243 = arith.mulf %230, %242 : vector<8x128xf32>
    %244 = arith.addf %239, %243 : vector<8x128xf32>
    %245 = math.tanh %244 : vector<8x128xf32>
    %cst_56 = arith.constant 1.000000e+00 : f32
    %246 = vector.broadcast %cst_56 : f32 to vector<8x128xf32>
    %247 = arith.subf %246, %238 : vector<8x128xf32>
    %248 = arith.mulf %247, %245 : vector<8x128xf32>
    %249 = arith.mulf %238, %214 : vector<8x128xf32>
    %250 = arith.addf %248, %249 : vector<8x128xf32>
    %251 = arith.index_cast %c6_i32 : i32 to index
    %c0_57 = arith.constant 0 : index
    %c0_58 = arith.constant 0 : index
    %252 = vector.load %arg4[%251, %c0_57, %c0_58] : memref<8x8x128xf32, #tpu.memory_space<vmem>>, vector<1x8x128xf32>
    %253 = vector.shape_cast %252 : vector<1x8x128xf32> to vector<8x128xf32>
    %254 = vector.shape_cast %250 : vector<8x128xf32> to vector<1x8x128xf32>
    tpu.vector_store %arg4[%251, %c0_57, %c0_58], %254 {strides = array<i32>} : memref<8x8x128xf32, #tpu.memory_space<vmem>>, vector<1x8x128xf32>,
    %c7_i32 = arith.constant 7 : i32
    %255 = arith.index_cast %c7_i32 : i32 to index
    %c0_59 = arith.constant 0 : index
    %c0_60 = arith.constant 0 : index
    %256 = vector.load %arg1[%255, %c0_59, %c0_60] : memref<8x8x384xf32, #tpu.memory_space<vmem>>, vector<1x8x384xf32>
    %257 = vector.shape_cast %256 : vector<1x8x384xf32> to vector<8x384xf32>
    %cst_61 = arith.constant dense<0.000000e+00> : vector<8x384xf32>
    %258 = tpu.matmul %250, %0, %cst_61 {dimension_numbers = #tpu.dot_dimension_numbers<[1], [0], [0], [1], [0, 0, 1, 1], [], []>} : vector<8x128xf32>, vector<128x384xf32>, vector<8x384xf32> -> vector<8x384xf32>
    %259 = vector.extract_strided_slice %257 {offsets = [0, 0], sizes = [8, 128], strides = [1, 1]} : vector<8x384xf32> to vector<8x128xf32>
    %260 = vector.extract_strided_slice %258 {offsets = [0, 0], sizes = [8, 128], strides = [1, 1]} : vector<8x384xf32> to vector<8x128xf32>
    %261 = arith.addf %259, %260 : vector<8x128xf32>
    %262 = arith.negf %261 : vector<8x128xf32>
    %263 = math.exp %262 : vector<8x128xf32>
    %cst_62 = arith.constant 1.000000e+00 : f32
    %264 = vector.broadcast %cst_62 : f32 to vector<8x128xf32>
    %265 = arith.addf %264, %263 : vector<8x128xf32>
    %266 = arith.divf %264, %265 : vector<8x128xf32>
    %267 = vector.extract_strided_slice %257 {offsets = [0, 128], sizes = [8, 128], strides = [1, 1]} : vector<8x384xf32> to vector<8x128xf32>
    %268 = vector.extract_strided_slice %258 {offsets = [0, 128], sizes = [8, 128], strides = [1, 1]} : vector<8x384xf32> to vector<8x128xf32>
    %269 = arith.addf %267, %268 : vector<8x128xf32>
    %270 = arith.negf %269 : vector<8x128xf32>
    %271 = math.exp %270 : vector<8x128xf32>
    %cst_63 = arith.constant 1.000000e+00 : f32
    %272 = vector.broadcast %cst_63 : f32 to vector<8x128xf32>
    %273 = arith.addf %272, %271 : vector<8x128xf32>
    %274 = arith.divf %272, %273 : vector<8x128xf32>
    %275 = vector.extract_strided_slice %257 {offsets = [0, 256], sizes = [8, 128], strides = [1, 1]} : vector<8x384xf32> to vector<8x128xf32>
    %276 = vector.extract_strided_slice %258 {offsets = [0, 256], sizes = [8, 128], strides = [1, 1]} : vector<8x384xf32> to vector<8x128xf32>
    %277 = vector.broadcast %1 : vector<1x128xf32> to vector<8x128xf32>
    %278 = arith.addf %276, %277 : vector<8x128xf32>
    %279 = arith.mulf %266, %278 : vector<8x128xf32>
    %280 = arith.addf %275, %279 : vector<8x128xf32>
    %281 = math.tanh %280 : vector<8x128xf32>
    %cst_64 = arith.constant 1.000000e+00 : f32
    %282 = vector.broadcast %cst_64 : f32 to vector<8x128xf32>
    %283 = arith.subf %282, %274 : vector<8x128xf32>
    %284 = arith.mulf %283, %281 : vector<8x128xf32>
    %285 = arith.mulf %274, %250 : vector<8x128xf32>
    %286 = arith.addf %284, %285 : vector<8x128xf32>
    %287 = arith.index_cast %c7_i32 : i32 to index
    %c0_65 = arith.constant 0 : index
    %c0_66 = arith.constant 0 : index
    %288 = vector.load %arg4[%287, %c0_65, %c0_66] : memref<8x8x128xf32, #tpu.memory_space<vmem>>, vector<1x8x128xf32>
    %289 = vector.shape_cast %288 : vector<1x8x128xf32> to vector<8x128xf32>
    %290 = vector.shape_cast %286 : vector<8x128xf32> to vector<1x8x128xf32>
    tpu.vector_store %arg4[%287, %c0_65, %c0_66], %290 {strides = array<i32>} : memref<8x8x128xf32, #tpu.memory_space<vmem>>, vector<1x8x128xf32>,
    %c8_i32 = arith.constant 8 : i32
    return
  }
  func.func @transform_0(%arg0: i32) -> (i32, i32, i32) {
    %c0_i32 = arith.constant 0 : i32
    %c0_i32_0 = arith.constant 0 : i32
    %c0_i32_1 = arith.constant 0 : i32
    %c0_i32_2 = arith.constant 0 : i32
    return %c0_i32, %c0_i32_0, %c0_i32_1 : i32, i32, i32
  }
  func.func @transform_1(%arg0: i32) -> (i32, i32) {
    %c0_i32 = arith.constant 0 : i32
    %c0_i32_0 = arith.constant 0 : i32
    %c0_i32_1 = arith.constant 0 : i32
    return %c0_i32, %c0_i32_0 : i32, i32
  }
  func.func @transform_2(%arg0: i32) -> (i32, i32) {
    %c0_i32 = arith.constant 0 : i32
    %c0_i32_0 = arith.constant 0 : i32
    %c0_i32_1 = arith.constant 0 : i32
    return %c0_i32, %c0_i32_0 : i32, i32
  }
  func.func @transform_3(%arg0: i32) -> (i32, i32, i32) {
    %c0_i32 = arith.constant 0 : i32
    %c0_i32_0 = arith.constant 0 : i32
    %c0_i32_1 = arith.constant 0 : i32
    %c0_i32_2 = arith.constant 0 : i32
    return %c0_i32, %c0_i32_0, %c0_i32_1 : i32, i32, i32
  }
}

</mosaic_0001>

<llo_original>
// kernel: tpu_custom_call.1
$region0: #{tpu_custom_call.1}
  #allocation0 [shape = 'u32[]', space=smem, size = 0x4, offset = 0x4, fixed_abs, tag = 'smem constant byte address 0x4 - core index']
  #allocation1 [shape = 'u32[144,128]{1,0:T(1,128)}', space=vmem, size = 0x12000, scoped, tag = 'internal scratch']
  %s0 = inlined_call_operand.hbm [shape: f32[8,8,384], index: 0, kind: input, shape index: {}]
  %s1 = inlined_call_operand.hbm [shape: f32[128,384], index: 1, kind: input, shape index: {}]
  %s2 = inlined_call_operand.vmem [shape: f32[1,128], index: 2, kind: input, shape index: {}]
  %s3 = inlined_call_operand.hbm [shape: f32[8,8,128], index: 3, kind: output, shape index: {}]
  %s4 = sld [smem:[#allocation0]]
  $region30: #{tpu_custom_call.1} parent=0
    _
  %s6 = ssub.s32 1, %s4
  %s7 = scalar_select 0, %s6, %s4
  $region1: #{tpu_custom_call.1} parent=0
    #allocation2 [shape = 'u8[98304]{0}', space=vmem, size = 0x18000, scoped, tag = 'input window, operand 0, single buffered']
    #allocation3 [shape = 's32[1]{0}', space=sflag, size = 0x4, scoped, tag = 'scoped memory for tpu_custom_call.1']
    #allocation4 [shape = 's32[1]{0}', space=sflag, size = 0x4, scoped, tag = 'scoped memory for tpu_custom_call.1']
    #allocation5 [shape = 'u8[196608]{0}', space=vmem, size = 0x30000, scoped, tag = 'input window, operand 1, single buffered']
    #allocation6 [shape = 's32[1]{0}', space=sflag, size = 0x4, scoped, tag = 'scoped memory for tpu_custom_call.1']
    #allocation7 [shape = 'u8[32768]{0}', space=vmem, size = 0x8000, scoped, tag = 'output window, operand 0, single buffered']
    %8 = vsyncpa [#allocation3], 0
    %9 = vsyncpa [#allocation6], 0
    %10 = vsyncpa [#allocation4], 0
    // Predicated region
    $region2: #{tpu_custom_call.1} parent=1 // pred_check
      _
    $region3: #{tpu_custom_call.1} parent=1 // pred_check_branch
      %12 = sbr.rel (0) target = $region5
    $region4: #{tpu_custom_call.1} parent=1 // pred_region
      %s14 = ssub.s32 3072, 3072
      %15 = vsyncadd [#allocation3], %s14
      %s16 = sshll.u32 [#allocation2], 4
      %s17 = int_to_ptr.vmem [resolvable:$true] %s16
      %22 = dma.hbm_to_vmem [thread:$0]  %s0, 3072, %s17, [#allocation3], 384, 384, 24
    $region5: #{tpu_custom_call.1} parent=1 // pred_fallthru
      _
    // Predicated region
    $region6: #{tpu_custom_call.1} parent=1 // pred_check
      _
    $region7: #{tpu_custom_call.1} parent=1 // pred_check_branch
      %24 = sbr.rel (0) target = $region9
    $region8: #{tpu_custom_call.1} parent=1 // pred_region
      %s26 = ssub.s32 6144, 6144
      %27 = vsyncadd [#allocation6], %s26
      %s28 = sshll.u32 [#allocation5], 4
      %s29 = int_to_ptr.vmem [resolvable:$true] %s28
      %34 = dma.hbm_to_vmem [thread:$0]  %s1, 6144, %s29, [#allocation6], 384, 384, 24
    $region9: #{tpu_custom_call.1} parent=1 // pred_fallthru
      _
    // Predicated region
    $region10: #{tpu_custom_call.1} parent=1 // pred_check
      _
    $region11: #{tpu_custom_call.1} parent=1 // pred_check_branch
      %36 = sbr.rel (0) target = $region13
    $region12: #{tpu_custom_call.1} parent=1 // pred_region
      _
    $region13: #{tpu_custom_call.1} parent=1 // pred_fallthru
      _
    // Predicated region
    $region14: #{tpu_custom_call.1} parent=1 // pred_check
      _
    $region15: #{tpu_custom_call.1} parent=1 // pred_check_branch
      %38 = sbr.rel (0) target = $region17
    $region16: #{tpu_custom_call.1} parent=1 // pred_region
      %39 = dma.done [#allocation3], 3072
    $region17: #{tpu_custom_call.1} parent=1 // pred_fallthru
      _
    // Predicated region
    $region18: #{tpu_custom_call.1} parent=1 // pred_check
      _
    $region19: #{tpu_custom_call.1} parent=1 // pred_check_branch
      %41 = sbr.rel (0) target = $region21
    $region20: #{tpu_custom_call.1} parent=1 // pred_region
      %42 = dma.done [#allocation6], 6144
    $region21: #{tpu_custom_call.1} parent=1 // pred_fallthru
      _
    %v43 = vld [vmem:[#allocation5] sm:$0xff]
    %v44 = vld [vmem:[#allocation5 + $0x8] sm:$0xff]
    %v45 = vld [vmem:[#allocation5 + $0x10] sm:$0xff]
    %v46 = vld [vmem:[#allocation5 + $0x18] sm:$0xff]
    %v47 = vld [vmem:[#allocation5 + $0x20] sm:$0xff]
    %v48 = vld [vmem:[#allocation5 + $0x28] sm:$0xff]
    %v49 = vld [vmem:[#allocation5 + $0x30] sm:$0xff]
    %v50 = vld [vmem:[#allocation5 + $0x38] sm:$0xff]
    %v51 = vld [vmem:[#allocation5 + $0x40] sm:$0xff]
    %v52 = vld [vmem:[#allocation5 + $0x48] sm:$0xff]
    %v53 = vld [vmem:[#allocation5 + $0x50] sm:$0xff]
    %v54 = vld [vmem:[#allocation5 + $0x58] sm:$0xff]
    %v55 = vld [vmem:[#allocation5 + $0x60] sm:$0xff]
    %v56 = vld [vmem:[#allocation5 + $0x68] sm:$0xff]
    %v57 = vld [vmem:[#allocation5 + $0x70] sm:$0xff]
    %v58 = vld [vmem:[#allocation5 + $0x78] sm:$0xff]
    %v59 = vld [vmem:[#allocation5 + $0x80] sm:$0xff]
    %v60 = vld [vmem:[#allocation5 + $0x88] sm:$0xff]
    %v61 = vld [vmem:[#allocation5 + $0x90] sm:$0xff]
    %v62 = vld [vmem:[#allocation5 + $0x98] sm:$0xff]
    %v63 = vld [vmem:[#allocation5 + $0xa0] sm:$0xff]
    %v64 = vld [vmem:[#allocation5 + $0xa8] sm:$0xff]
    %v65 = vld [vmem:[#allocation5 + $0xb0] sm:$0xff]
    %v66 = vld [vmem:[#allocation5 + $0xb8] sm:$0xff]
    %v67 = vld [vmem:[#allocation5 + $0xc0] sm:$0xff]
    %v68 = vld [vmem:[#allocation5 + $0xc8] sm:$0xff]
    %v69 = vld [vmem:[#allocation5 + $0xd0] sm:$0xff]
    %v70 = vld [vmem:[#allocation5 + $0xd8] sm:$0xff]
    %v71 = vld [vmem:[#allocation5 + $0xe0] sm:$0xff]
    %v72 = vld [vmem:[#allocation5 + $0xe8] sm:$0xff]
    %v73 = vld [vmem:[#allocation5 + $0xf0] sm:$0xff]
    %v74 = vld [vmem:[#allocation5 + $0xf8] sm:$0xff]
    %v75 = vld [vmem:[#allocation5 + $0x100] sm:$0xff]
    %v76 = vld [vmem:[#allocation5 + $0x108] sm:$0xff]
    %v77 = vld [vmem:[#allocation5 + $0x110] sm:$0xff]
    %v78 = vld [vmem:[#allocation5 + $0x118] sm:$0xff]
    %v79 = vld [vmem:[#allocation5 + $0x120] sm:$0xff]
    %v80 = vld [vmem:[#allocation5 + $0x128] sm:$0xff]
    %v81 = vld [vmem:[#allocation5 + $0x130] sm:$0xff]
    %v82 = vld [vmem:[#allocation5 + $0x138] sm:$0xff]
    %v83 = vld [vmem:[#allocation5 + $0x140] sm:$0xff]
    %v84 = vld [vmem:[#allocation5 + $0x148] sm:$0xff]
    %v85 = vld [vmem:[#allocation5 + $0x150] sm:$0xff]
    %v86 = vld [vmem:[#allocation5 + $0x158] sm:$0xff]
    %v87 = vld [vmem:[#allocation5 + $0x160] sm:$0xff]
    %v88 = vld [vmem:[#allocation5 + $0x168] sm:$0xff]
    %v89 = vld [vmem:[#allocation5 + $0x170] sm:$0xff]
    %v90 = vld [vmem:[#allocation5 + $0x178] sm:$0xff]
    %v91 = vld [vmem:[%s2] sm:$0x1]
    %v92 = vld [vmem:[#allocation2] sm:$0xff]
    %v93 = vld [vmem:[#allocation2 + $0x8] sm:$0xff]
    %v94 = vld [vmem:[#allocation2 + $0x10] sm:$0xff]
    %95 = vmatprep.subr.mxu0 %v44
    %96 = vmatpush1.msra.mxu0 %v43
    %97 = vmatprep.subr.mxu0 %v47
    %98 = vmatpush1.msra.mxu0 %v46
    %99 = vmatprep.subr.mxu0 %v50
    %100 = vmatpush1.msra.mxu0 %v49
    %101 = vmatprep.subr.mxu0 %v53
    %102 = vmatpush1.msra.mxu0 %v52
    %103 = vmatprep.subr.mxu0 %v56
    %104 = vmatpush1.msra.mxu0 %v55
    %105 = vmatprep.subr.mxu0 %v59
    %106 = vmatpush1.msra.mxu0 %v58
    %107 = vmatprep.subr.mxu0 %v62
    %108 = vmatpush1.msra.mxu0 %v61
    %109 = vmatprep.subr.mxu0 %v65
    %110 = vmatpush1.msra.mxu0 %v64
    %111 = vmatprep.subr.mxu0 %v68
    %112 = vmatpush1.msra.mxu0 %v67
    %113 = vmatprep.subr.mxu0 %v71
    %114 = vmatpush1.msra.mxu0 %v70
    %115 = vmatprep.subr.mxu0 %v74
    %116 = vmatpush1.msra.mxu0 %v73
    %117 = vmatprep.subr.mxu0 %v77
    %118 = vmatpush1.msra.mxu0 %v76
    %119 = vmatprep.subr.mxu0 %v80
    %120 = vmatpush1.msra.mxu0 %v79
    %121 = vmatprep.subr.mxu0 %v83
    %122 = vmatpush1.msra.mxu0 %v82
    %123 = vmatprep.subr.mxu0 %v86
    %124 = vmatpush1.msra.mxu0 %v85
    %125 = vmatprep.subr.mxu0 %v89
    %126 = vmatpush1.msra.mxu0 %v88
    %127 = vmatprep.subr.mxu0 0.0
    %128 = vmatpush1.msra.mxu0 0.0
    %129 = vmatprep.subr.mxu0 0.0
    %130 = vmatpush1.msra.mxu0 0.0
    %131 = vmatprep.subr.mxu0 0.0
    %132 = vmatpush1.msra.mxu0 0.0
    %133 = vmatprep.subr.mxu0 0.0
    %134 = vmatpush1.msra.mxu0 0.0
    %135 = vmatprep.subr.mxu0 0.0
    %136 = vmatpush1.msra.mxu0 0.0
    %137 = vmatprep.subr.mxu0 0.0
    %138 = vmatpush1.msra.mxu0 0.0
    %139 = vmatprep.subr.mxu0 0.0
    %140 = vmatpush1.msra.mxu0 0.0
    %141 = vmatprep.subr.mxu0 0.0
    %142 = vmatpush1.msra.mxu0 0.0
    %143 = vmatprep.subr.mxu0 0.0
    %144 = vmatpush1.msra.mxu0 0.0
    %145 = vmatprep.subr.mxu0 0.0
    %146 = vmatpush1.msra.mxu0 0.0
    %147 = vmatprep.subr.mxu0 0.0
    %148 = vmatpush1.msra.mxu0 0.0
    %149 = vmatprep.subr.mxu0 0.0
    %150 = vmatpush1.msra.mxu0 0.0
    %151 = vmatprep.subr.mxu0 0.0
    %152 = vmatpush1.msra.mxu0 0.0
    %153 = vmatprep.subr.mxu0 0.0
    %154 = vmatpush1.msra.mxu0 0.0
    %155 = vmatprep.subr.mxu0 0.0
    %156 = vmatpush1.msra.mxu0 0.0
    %157 = vmatprep.subr.mxu0 0.0
    %158 = vmatpush1.msra.mxu0 0.0
    %159 = vmatprep.mubr.f32.mxu0 0.0
    %160 = vmatmul.mubr.f32.gmra.mrb[0].mxu0 0.0
    %v161 = vpop.f32.mrb[0].mxu0
    %v162 = vadd.f32 0.0, %v161
    %v163 = vpop.f32.mrb[0].mxu0
    %v164 = vadd.f32 0.0, %v163
    %165 = vdwg.mxu0
    %166 = vmatprep.subr.mxu0 0.0
    %167 = vmatpush1.msra.mxu0 %v45
    %168 = vmatprep.subr.mxu0 0.0
    %169 = vmatpush1.msra.mxu0 %v48
    %170 = vmatprep.subr.mxu0 0.0
    %171 = vmatpush1.msra.mxu0 %v51
    %172 = vmatprep.subr.mxu0 0.0
    %173 = vmatpush1.msra.mxu0 %v54
    %174 = vmatprep.subr.mxu0 0.0
    %175 = vmatpush1.msra.mxu0 %v57
    %176 = vmatprep.subr.mxu0 0.0
    %177 = vmatpush1.msra.mxu0 %v60
    %178 = vmatprep.subr.mxu0 0.0
    %179 = vmatpush1.msra.mxu0 %v63
    %180 = vmatprep.subr.mxu0 0.0
    %181 = vmatpush1.msra.mxu0 %v66
    %182 = vmatprep.subr.mxu0 0.0
    %183 = vmatpush1.msra.mxu0 %v69
    %184 = vmatprep.subr.mxu0 0.0
    %185 = vmatpush1.msra.mxu0 %v72
    %186 = vmatprep.subr.mxu0 0.0
    %187 = vmatpush1.msra.mxu0 %v75
    %188 = vmatprep.subr.mxu0 0.0
    %189 = vmatpush1.msra.mxu0 %v78
    %190 = vmatprep.subr.mxu0 0.0
    %191 = vmatpush1.msra.mxu0 %v81
    %192 = vmatprep.subr.mxu0 0.0
    %193 = vmatpush1.msra.mxu0 %v84
    %194 = vmatprep.subr.mxu0 0.0
    %195 = vmatpush1.msra.mxu0 %v87
    %196 = vmatprep.subr.mxu0 0.0
    %197 = vmatpush1.msra.mxu0 %v90
    %198 = vmatprep.subr.mxu0 0.0
    %199 = vmatpush1.msra.mxu0 0.0
    %200 = vmatprep.subr.mxu0 0.0
    %201 = vmatpush1.msra.mxu0 0.0
    %202 = vmatprep.subr.mxu0 0.0
    %203 = vmatpush1.msra.mxu0 0.0
    %204 = vmatprep.subr.mxu0 0.0
    %205 = vmatpush1.msra.mxu0 0.0
    %206 = vmatprep.subr.mxu0 0.0
    %207 = vmatpush1.msra.mxu0 0.0
    %208 = vmatprep.subr.mxu0 0.0
    %209 = vmatpush1.msra.mxu0 0.0
    %210 = vmatprep.subr.mxu0 0.0
    %211 = vmatpush1.msra.mxu0 0.0
    %212 = vmatprep.subr.mxu0 0.0
    %213 = vmatpush1.msra.mxu0 0.0
    %214 = vmatprep.subr.mxu0 0.0
    %215 = vmatpush1.msra.mxu0 0.0
    %216 = vmatprep.subr.mxu0 0.0
    %217 = vmatpush1.msra.mxu0 0.0
    %218 = vmatprep.subr.mxu0 0.0
    %219 = vmatpush1.msra.mxu0 0.0
    %220 = vmatprep.subr.mxu0 0.0
    %221 = vmatpush1.msra.mxu0 0.0
    %222 = vmatprep.subr.mxu0 0.0
    %223 = vmatpush1.msra.mxu0 0.0
    %224 = vmatprep.subr.mxu0 0.0
    %225 = vmatpush1.msra.mxu0 0.0
    %226 = vmatprep.subr.mxu0 0.0
    %227 = vmatpush1.msra.mxu0 0.0
    %228 = vmatprep.subr.mxu0 0.0
    %229 = vmatpush1.msra.mxu0 0.0
    %230 = vmatprep.mubr.f32.mxu0 0.0
    %231 = vmatmul.mubr.f32.gmra.mrb[0].mxu0 0.0
    %v232 = vpop.f32.mrb[0].mxu0
    %v233 = vadd.f32 0.0, %v232
    %v234 = vpop.f32.mrb[0].mxu0
    %235 = vdwg.mxu0
    %v236 = vadd.f32 %v92, %v162
    %v237 = vxor.u32 %v236, 2147483648
    %v238 = vmul.f32 %v237, 1.442695
    %v239 = vpow.pop %v238
    %v240 = vadd.f32 %v239, 1.0
    %v241 = vrcp.pop %v240
    %v242 = vmul.f32 1.0, %v241
    %v243 = vadd.f32 %v93, %v164
    %v244 = vxor.u32 %v243, 2147483648
    %v245 = vmul.f32 %v244, 1.442695
    %v246 = vpow.pop %v245
    %v247 = vadd.f32 %v246, 1.0
    %v248 = vrcp.pop %v247
    %v249 = vmul.f32 1.0, %v248
    %v251 = vlaneseq
    %v252 = vshrl.u32 %v251, 7
    %v253 = vsub.s32 0, %v252
    %v254 = vrot.slane %v91, %v253
    %v256 = vadd.f32 %v233, %v254
    %v257 = vmul.f32 %v242, %v256
    %v258 = vadd.f32 %v94, %v257
    %v259 = vtanh.pop %v258
    %v260 = vsub.f32 1.0, %v249
    %v261 = vmul.f32 %v260, %v259
    %v262 = vmul.f32 %v249, 0.0
    %v263 = vadd.f32 %v261, %v262
    %264 = vst [vmem:[#allocation7] sm:$0xff] %v263
    %s265 = scalar_lea.vmem [#allocation2], 24
    %v266 = vld [vmem:[%s265] sm:$0xff]
    %v267 = vld [vmem:[%s265 + $0x8] sm:$0xff]
    %v268 = vld [vmem:[%s265 + $0x10] sm:$0xff]
    %269 = vmatprep.subr.mxu0 %v44
    %270 = vmatpush1.msra.mxu0 %v43
    %271 = vmatprep.subr.mxu0 %v47
    %272 = vmatpush1.msra.mxu0 %v46
    %273 = vmatprep.subr.mxu0 %v50
    %274 = vmatpush1.msra.mxu0 %v49
    %275 = vmatprep.subr.mxu0 %v53
    %276 = vmatpush1.msra.mxu0 %v52
    %277 = vmatprep.subr.mxu0 %v56
    %278 = vmatpush1.msra.mxu0 %v55
    %279 = vmatprep.subr.mxu0 %v59
    %280 = vmatpush1.msra.mxu0 %v58
    %281 = vmatprep.subr.mxu0 %v62
    %282 = vmatpush1.msra.mxu0 %v61
    %283 = vmatprep.subr.mxu0 %v65
    %284 = vmatpush1.msra.mxu0 %v64
    %285 = vmatprep.subr.mxu0 %v68
    %286 = vmatpush1.msra.mxu0 %v67
    %287 = vmatprep.subr.mxu0 %v71
    %288 = vmatpush1.msra.mxu0 %v70
    %289 = vmatprep.subr.mxu0 %v74
    %290 = vmatpush1.msra.mxu0 %v73
    %291 = vmatprep.subr.mxu0 %v77
    %292 = vmatpush1.msra.mxu0 %v76
    %293 = vmatprep.subr.mxu0 %v80
    %294 = vmatpush1.msra.mxu0 %v79
    %295 = vmatprep.subr.mxu0 %v83
    %296 = vmatpush1.msra.mxu0 %v82
    %297 = vmatprep.subr.mxu0 %v86
    %298 = vmatpush1.msra.mxu0 %v85
    %299 = vmatprep.subr.mxu0 %v89
    %300 = vmatpush1.msra.mxu0 %v88
    %301 = vmatprep.subr.mxu0 0.0
    %302 = vmatpush1.msra.mxu0 0.0
    %303 = vmatprep.subr.mxu0 0.0
    %304 = vmatpush1.msra.mxu0 0.0
    %305 = vmatprep.subr.mxu0 0.0
    %306 = vmatpush1.msra.mxu0 0.0
    %307 = vmatprep.subr.mxu0 0.0
    %308 = vmatpush1.msra.mxu0 0.0
    %309 = vmatprep.subr.mxu0 0.0
    %310 = vmatpush1.msra.mxu0 0.0
    %311 = vmatprep.subr.mxu0 0.0
    %312 = vmatpush1.msra.mxu0 0.0
    %313 = vmatprep.subr.mxu0 0.0
    %314 = vmatpush1.msra.mxu0 0.0
    %315 = vmatprep.subr.mxu0 0.0
    %316 = vmatpush1.msra.mxu0 0.0
    %317 = vmatprep.subr.mxu0 0.0
    %318 = vmatpush1.msra.mxu0 0.0
    %319 = vmatprep.subr.mxu0 0.0
    %320 = vmatpush1.msra.mxu0 0.0
    %321 = vmatprep.subr.mxu0 0.0
    %322 = vmatpush1.msra.mxu0 0.0
    %323 = vmatprep.subr.mxu0 0.0
    %324 = vmatpush1.msra.mxu0 0.0
    %325 = vmatprep.subr.mxu0 0.0
    %326 = vmatpush1.msra.mxu0 0.0
    %327 = vmatprep.subr.mxu0 0.0
    %328 = vmatpush1.msra.mxu0 0.0
    %329 = vmatprep.subr.mxu0 0.0
    %330 = vmatpush1.msra.mxu0 0.0
    %331 = vmatprep.subr.mxu0 0.0
    %332 = vmatpush1.msra.mxu0 0.0
    %333 = vmatprep.mubr.f32.mxu0 0.0
    %334 = vmatmul.mubr.f32.gmra.mrb[0].mxu0 %v263
    %v335 = vpop.f32.mrb[0].mxu0
    %v336 = vadd.f32 0.0, %v335
    %v337 = vpop.f32.mrb[0].mxu0
    %v338 = vadd.f32 0.0, %v337
    %339 = vdwg.mxu0
    %340 = vmatprep.subr.mxu0 0.0
    %341 = vmatpush1.msra.mxu0 %v45
    %342 = vmatprep.subr.mxu0 0.0
    %343 = vmatpush1.msra.mxu0 %v48
    %344 = vmatprep.subr.mxu0 0.0
    %345 = vmatpush1.msra.mxu0 %v51
    %346 = vmatprep.subr.mxu0 0.0
    %347 = vmatpush1.msra.mxu0 %v54
    %348 = vmatprep.subr.mxu0 0.0
    %349 = vmatpush1.msra.mxu0 %v57
    %350 = vmatprep.subr.mxu0 0.0
    %351 = vmatpush1.msra.mxu0 %v60
    %352 = vmatprep.subr.mxu0 0.0
    %353 = vmatpush1.msra.mxu0 %v63
    %354 = vmatprep.subr.mxu0 0.0
    %355 = vmatpush1.msra.mxu0 %v66
    %356 = vmatprep.subr.mxu0 0.0
    %357 = vmatpush1.msra.mxu0 %v69
    %358 = vmatprep.subr.mxu0 0.0
    %359 = vmatpush1.msra.mxu0 %v72
    %360 = vmatprep.subr.mxu0 0.0
    %361 = vmatpush1.msra.mxu0 %v75
    %362 = vmatprep.subr.mxu0 0.0
    %363 = vmatpush1.msra.mxu0 %v78
    %364 = vmatprep.subr.mxu0 0.0
    %365 = vmatpush1.msra.mxu0 %v81
    %366 = vmatprep.subr.mxu0 0.0
    %367 = vmatpush1.msra.mxu0 %v84
    %368 = vmatprep.subr.mxu0 0.0
    %369 = vmatpush1.msra.mxu0 %v87
    %370 = vmatprep.subr.mxu0 0.0
    %371 = vmatpush1.msra.mxu0 %v90
    %372 = vmatprep.subr.mxu0 0.0
    %373 = vmatpush1.msra.mxu0 0.0
    %374 = vmatprep.subr.mxu0 0.0
    %375 = vmatpush1.msra.mxu0 0.0
    %376 = vmatprep.subr.mxu0 0.0
    %377 = vmatpush1.msra.mxu0 0.0
    %378 = vmatprep.subr.mxu0 0.0
    %379 = vmatpush1.msra.mxu0 0.0
    %380 = vmatprep.subr.mxu0 0.0
    %381 = vmatpush1.msra.mxu0 0.0
    %382 = vmatprep.subr.mxu0 0.0
    %383 = vmatpush1.msra.mxu0 0.0
    %384 = vmatprep.subr.mxu0 0.0
    %385 = vmatpush1.msra.mxu0 0.0
    %386 = vmatprep.subr.mxu0 0.0
    %387 = vmatpush1.msra.mxu0 0.0
    %388 = vmatprep.subr.mxu0 0.0
    %389 = vmatpush1.msra.mxu0 0.0
    %390 = vmatprep.subr.mxu0 0.0
    %391 = vmatpush1.msra.mxu0 0.0
    %392 = vmatprep.subr.mxu0 0.0
    %393 = vmatpush1.msra.mxu0 0.0
    %394 = vmatprep.subr.mxu0 0.0
    %395 = vmatpush1.msra.mxu0 0.0
    %396 = vmatprep.subr.mxu0 0.0
    %397 = vmatpush1.msra.mxu0 0.0
    %398 = vmatprep.subr.mxu0 0.0
    %399 = vmatpush1.msra.mxu0 0.0
    %400 = vmatprep.subr.mxu0 0.0
    %401 = vmatpush1.msra.mxu0 0.0
    %402 = vmatprep.subr.mxu0 0.0
    %403 = vmatpush1.msra.mxu0 0.0
    %404 = vmatprep.mubr.f32.mxu0 0.0
    %405 = vmatmul.mubr.f32.gmra.mrb[0].mxu0 %v263
    %v406 = vpop.f32.mrb[0].mxu0
    %v407 = vadd.f32 0.0, %v406
    %v408 = vpop.f32.mrb[0].mxu0
    %409 = vdwg.mxu0
    %v410 = vadd.f32 %v266, %v336
    %v411 = vxor.u32 %v410, 2147483648
    %v412 = vmul.f32 %v411, 1.442695
    %v413 = vpow.pop %v412
    %v414 = vadd.f32 %v413, 1.0
    %v415 = vrcp.pop %v414
    %v416 = vmul.f32 1.0, %v415
    %v417 = vadd.f32 %v267, %v338
    %v418 = vxor.u32 %v417, 2147483648
    %v419 = vmul.f32 %v418, 1.442695
    %v420 = vpow.pop %v419
    %v421 = vadd.f32 %v420, 1.0
    %v422 = vrcp.pop %v421
    %v423 = vmul.f32 1.0, %v422
    %v424 = vadd.f32 %v407, %v254
    %v425 = vmul.f32 %v416, %v424
    %v426 = vadd.f32 %v268, %v425
    %v427 = vtanh.pop %v426
    %v428 = vsub.f32 1.0, %v423
    %v429 = vmul.f32 %v428, %v427
    %v430 = vmul.f32 %v423, %v263
    %v431 = vadd.f32 %v429, %v430
    %s432 = scalar_lea.vmem [#allocation7], 8
    %433 = vst [vmem:[%s432] sm:$0xff] %v431
    %s434 = scalar_lea.vmem [#allocation2], 48
    %v435 = vld [vmem:[%s434] sm:$0xff]
    %v436 = vld [vmem:[%s434 + $0x8] sm:$0xff]
    %v437 = vld [vmem:[%s434 + $0x10] sm:$0xff]
    %438 = vmatprep.subr.mxu0 %v44
    %439 = vmatpush1.msra.mxu0 %v43
    %440 = vmatprep.subr.mxu0 %v47
    %441 = vmatpush1.msra.mxu0 %v46
    %442 = vmatprep.subr.mxu0 %v50
    %443 = vmatpush1.msra.mxu0 %v49
    %444 = vmatprep.subr.mxu0 %v53
    %445 = vmatpush1.msra.mxu0 %v52
    %446 = vmatprep.subr.mxu0 %v56
    %447 = vmatpush1.msra.mxu0 %v55
    %448 = vmatprep.subr.mxu0 %v59
    %449 = vmatpush1.msra.mxu0 %v58
    %450 = vmatprep.subr.mxu0 %v62
    %451 = vmatpush1.msra.mxu0 %v61
    %452 = vmatprep.subr.mxu0 %v65
    %453 = vmatpush1.msra.mxu0 %v64
    %454 = vmatprep.subr.mxu0 %v68
    %455 = vmatpush1.msra.mxu0 %v67
    %456 = vmatprep.subr.mxu0 %v71
    %457 = vmatpush1.msra.mxu0 %v70
    %458 = vmatprep.subr.mxu0 %v74
    %459 = vmatpush1.msra.mxu0 %v73
    %460 = vmatprep.subr.mxu0 %v77
    %461 = vmatpush1.msra.mxu0 %v76
    %462 = vmatprep.subr.mxu0 %v80
    %463 = vmatpush1.msra.mxu0 %v79
    %464 = vmatprep.subr.mxu0 %v83
    %465 = vmatpush1.msra.mxu0 %v82
    %466 = vmatprep.subr.mxu0 %v86
    %467 = vmatpush1.msra.mxu0 %v85
    %468 = vmatprep.subr.mxu0 %v89
    %469 = vmatpush1.msra.mxu0 %v88
    %470 = vmatprep.subr.mxu0 0.0
    %471 = vmatpush1.msra.mxu0 0.0
    %472 = vmatprep.subr.mxu0 0.0
    %473 = vmatpush1.msra.mxu0 0.0
    %474 = vmatprep.subr.mxu0 0.0
    %475 = vmatpush1.msra.mxu0 0.0
    %476 = vmatprep.subr.mxu0 0.0
    %477 = vmatpush1.msra.mxu0 0.0
    %478 = vmatprep.subr.mxu0 0.0
    %479 = vmatpush1.msra.mxu0 0.0
    %480 = vmatprep.subr.mxu0 0.0
    %481 = vmatpush1.msra.mxu0 0.0
    %482 = vmatprep.subr.mxu0 0.0
    %483 = vmatpush1.msra.mxu0 0.0
    %484 = vmatprep.subr.mxu0 0.0
    %485 = vmatpush1.msra.mxu0 0.0
    %486 = vmatprep.subr.mxu0 0.0
    %487 = vmatpush1.msra.mxu0 0.0
    %488 = vmatprep.subr.mxu0 0.0
    %489 = vmatpush1.msra.mxu0 0.0
    %490 = vmatprep.subr.mxu0 0.0
    %491 = vmatpush1.msra.mxu0 0.0
    %492 = vmatprep.subr.mxu0 0.0
    %493 = vmatpush1.msra.mxu0 0.0
    %494 = vmatprep.subr.mxu0 0.0
    %495 = vmatpush1.msra.mxu0 0.0
    %496 = vmatprep.subr.mxu0 0.0
    %497 = vmatpush1.msra.mxu0 0.0
    %498 = vmatprep.subr.mxu0 0.0
    %499 = vmatpush1.msra.mxu0 0.0
    %500 = vmatprep.subr.mxu0 0.0
    %501 = vmatpush1.msra.mxu0 0.0
    %502 = vmatprep.mubr.f32.mxu0 0.0
    %503 = vmatmul.mubr.f32.gmra.mrb[0].mxu0 %v431
    %v504 = vpop.f32.mrb[0].mxu0
    %v505 = vadd.f32 0.0, %v504
    %v506 = vpop.f32.mrb[0].mxu0
    %v507 = vadd.f32 0.0, %v506
    %508 = vdwg.mxu0
    %509 = vmatprep.subr.mxu0 0.0
    %510 = vmatpush1.msra.mxu0 %v45
    %511 = vmatprep.subr.mxu0 0.0
    %512 = vmatpush1.msra.mxu0 %v48
    %513 = vmatprep.subr.mxu0 0.0
    %514 = vmatpush1.msra.mxu0 %v51
    %515 = vmatprep.subr.mxu0 0.0
    %516 = vmatpush1.msra.mxu0 %v54
    %517 = vmatprep.subr.mxu0 0.0
    %518 = vmatpush1.msra.mxu0 %v57
    %519 = vmatprep.subr.mxu0 0.0
    %520 = vmatpush1.msra.mxu0 %v60
    %521 = vmatprep.subr.mxu0 0.0
    %522 = vmatpush1.msra.mxu0 %v63
    %523 = vmatprep.subr.mxu0 0.0
    %524 = vmatpush1.msra.mxu0 %v66
    %525 = vmatprep.subr.mxu0 0.0
    %526 = vmatpush1.msra.mxu0 %v69
    %527 = vmatprep.subr.mxu0 0.0
    %528 = vmatpush1.msra.mxu0 %v72
    %529 = vmatprep.subr.mxu0 0.0
    %530 = vmatpush1.msra.mxu0 %v75
    %531 = vmatprep.subr.mxu0 0.0
    %532 = vmatpush1.msra.mxu0 %v78
    %533 = vmatprep.subr.mxu0 0.0
    %534 = vmatpush1.msra.mxu0 %v81
    %535 = vmatprep.subr.mxu0 0.0
    %536 = vmatpush1.msra.mxu0 %v84
    %537 = vmatprep.subr.mxu0 0.0
    %538 = vmatpush1.msra.mxu0 %v87
    %539 = vmatprep.subr.mxu0 0.0
    %540 = vmatpush1.msra.mxu0 %v90
    %541 = vmatprep.subr.mxu0 0.0
    %542 = vmatpush1.msra.mxu0 0.0
    %543 = vmatprep.subr.mxu0 0.0
    %544 = vmatpush1.msra.mxu0 0.0
    %545 = vmatprep.subr.mxu0 0.0
    %546 = vmatpush1.msra.mxu0 0.0
    %547 = vmatprep.subr.mxu0 0.0
    %548 = vmatpush1.msra.mxu0 0.0
    %549 = vmatprep.subr.mxu0 0.0
    %550 = vmatpush1.msra.mxu0 0.0
    %551 = vmatprep.subr.mxu0 0.0
    %552 = vmatpush1.msra.mxu0 0.0
    %553 = vmatprep.subr.mxu0 0.0
    %554 = vmatpush1.msra.mxu0 0.0
    %555 = vmatprep.subr.mxu0 0.0
    %556 = vmatpush1.msra.mxu0 0.0
    %557 = vmatprep.subr.mxu0 0.0
    %558 = vmatpush1.msra.mxu0 0.0
    %559 = vmatprep.subr.mxu0 0.0
    %560 = vmatpush1.msra.mxu0 0.0
    %561 = vmatprep.subr.mxu0 0.0
    %562 = vmatpush1.msra.mxu0 0.0
    %563 = vmatprep.subr.mxu0 0.0
    %564 = vmatpush1.msra.mxu0 0.0
    %565 = vmatprep.subr.mxu0 0.0
    %566 = vmatpush1.msra.mxu0 0.0
    %567 = vmatprep.subr.mxu0 0.0
    %568 = vmatpush1.msra.mxu0 0.0
    %569 = vmatprep.subr.mxu0 0.0
    %570 = vmatpush1.msra.mxu0 0.0
    %571 = vmatprep.subr.mxu0 0.0
    %572 = vmatpush1.msra.mxu0 0.0
    %573 = vmatprep.mubr.f32.mxu0 0.0
    %574 = vmatmul.mubr.f32.gmra.mrb[0].mxu0 %v431
    %v575 = vpop.f32.mrb[0].mxu0
    %v576 = vadd.f32 0.0, %v575
    %v577 = vpop.f32.mrb[0].mxu0
    %578 = vdwg.mxu0
    %v579 = vadd.f32 %v435, %v505
    %v580 = vxor.u32 %v579, 2147483648
    %v581 = vmul.f32 %v580, 1.442695
    %v582 = vpow.pop %v581
    %v583 = vadd.f32 %v582, 1.0
    %v584 = vrcp.pop %v583
    %v585 = vmul.f32 1.0, %v584
    %v586 = vadd.f32 %v436, %v507
    %v587 = vxor.u32 %v586, 2147483648
    %v588 = vmul.f32 %v587, 1.442695
    %v589 = vpow.pop %v588
    %v590 = vadd.f32 %v589, 1.0
    %v591 = vrcp.pop %v590
    %v592 = vmul.f32 1.0, %v591
    %v593 = vadd.f32 %v576, %v254
    %v594 = vmul.f32 %v585, %v593
    %v595 = vadd.f32 %v437, %v594
    %v596 = vtanh.pop %v595
    %v597 = vsub.f32 1.0, %v592
    %v598 = vmul.f32 %v597, %v596
    %v599 = vmul.f32 %v592, %v431
    %v600 = vadd.f32 %v598, %v599
    %s601 = scalar_lea.vmem [#allocation7], 16
    %602 = vst [vmem:[%s601] sm:$0xff] %v600
    %s603 = scalar_lea.vmem [#allocation2], 72
    %v604 = vld [vmem:[%s603] sm:$0xff]
    %v605 = vld [vmem:[%s603 + $0x8] sm:$0xff]
    %v606 = vld [vmem:[%s603 + $0x10] sm:$0xff]
    %607 = vmatprep.subr.mxu0 %v44
    %608 = vmatpush1.msra.mxu0 %v43
    %609 = vmatprep.subr.mxu0 %v47
    %610 = vmatpush1.msra.mxu0 %v46
    %611 = vmatprep.subr.mxu0 %v50
    %612 = vmatpush1.msra.mxu0 %v49
    %613 = vmatprep.subr.mxu0 %v53
    %614 = vmatpush1.msra.mxu0 %v52
    %615 = vmatprep.subr.mxu0 %v56
    %616 = vmatpush1.msra.mxu0 %v55
    %617 = vmatprep.subr.mxu0 %v59
    %618 = vmatpush1.msra.mxu0 %v58
    %619 = vmatprep.subr.mxu0 %v62
    %620 = vmatpush1.msra.mxu0 %v61
    %621 = vmatprep.subr.mxu0 %v65
    %622 = vmatpush1.msra.mxu0 %v64
    %623 = vmatprep.subr.mxu0 %v68
    %624 = vmatpush1.msra.mxu0 %v67
    %625 = vmatprep.subr.mxu0 %v71
    %626 = vmatpush1.msra.mxu0 %v70
    %627 = vmatprep.subr.mxu0 %v74
    %628 = vmatpush1.msra.mxu0 %v73
    %629 = vmatprep.subr.mxu0 %v77
    %630 = vmatpush1.msra.mxu0 %v76
    %631 = vmatprep.subr.mxu0 %v80
    %632 = vmatpush1.msra.mxu0 %v79
    %633 = vmatprep.subr.mxu0 %v83
    %634 = vmatpush1.msra.mxu0 %v82
    %635 = vmatprep.subr.mxu0 %v86
    %636 = vmatpush1.msra.mxu0 %v85
    %637 = vmatprep.subr.mxu0 %v89
    %638 = vmatpush1.msra.mxu0 %v88
    %639 = vmatprep.subr.mxu0 0.0
    %640 = vmatpush1.msra.mxu0 0.0
    %641 = vmatprep.subr.mxu0 0.0
    %642 = vmatpush1.msra.mxu0 0.0
    %643 = vmatprep.subr.mxu0 0.0
    %644 = vmatpush1.msra.mxu0 0.0
    %645 = vmatprep.subr.mxu0 0.0
    %646 = vmatpush1.msra.mxu0 0.0
    %647 = vmatprep.subr.mxu0 0.0
    %648 = vmatpush1.msra.mxu0 0.0
    %649 = vmatprep.subr.mxu0 0.0
    %650 = vmatpush1.msra.mxu0 0.0
    %651 = vmatprep.subr.mxu0 0.0
    %652 = vmatpush1.msra.mxu0 0.0
    %653 = vmatprep.subr.mxu0 0.0
    %654 = vmatpush1.msra.mxu0 0.0
    %655 = vmatprep.subr.mxu0 0.0
    %656 = vmatpush1.msra.mxu0 0.0
    %657 = vmatprep.subr.mxu0 0.0
    %658 = vmatpush1.msra.mxu0 0.0
    %659 = vmatprep.subr.mxu0 0.0
    %660 = vmatpush1.msra.mxu0 0.0
    %661 = vmatprep.subr.mxu0 0.0
    %662 = vmatpush1.msra.mxu0 0.0
    %663 = vmatprep.subr.mxu0 0.0
    %664 = vmatpush1.msra.mxu0 0.0
    %665 = vmatprep.subr.mxu0 0.0
    %666 = vmatpush1.msra.mxu0 0.0
    %667 = vmatprep.subr.mxu0 0.0
    %668 = vmatpush1.msra.mxu0 0.0
    %669 = vmatprep.subr.mxu0 0.0
    %670 = vmatpush1.msra.mxu0 0.0
    %671 = vmatprep.mubr.f32.mxu0 0.0
    %672 = vmatmul.mubr.f32.gmra.mrb[0].mxu0 %v600
    %v673 = vpop.f32.mrb[0].mxu0
    %v674 = vadd.f32 0.0, %v673
    %v675 = vpop.f32.mrb[0].mxu0
    %v676 = vadd.f32 0.0, %v675
    %677 = vdwg.mxu0
    %678 = vmatprep.subr.mxu0 0.0
    %679 = vmatpush1.msra.mxu0 %v45
    %680 = vmatprep.subr.mxu0 0.0
    %681 = vmatpush1.msra.mxu0 %v48
    %682 = vmatprep.subr.mxu0 0.0
    %683 = vmatpush1.msra.mxu0 %v51
    %684 = vmatprep.subr.mxu0 0.0
    %685 = vmatpush1.msra.mxu0 %v54
    %686 = vmatprep.subr.mxu0 0.0
    %687 = vmatpush1.msra.mxu0 %v57
    %688 = vmatprep.subr.mxu0 0.0
    %689 = vmatpush1.msra.mxu0 %v60
    %690 = vmatprep.subr.mxu0 0.0
    %691 = vmatpush1.msra.mxu0 %v63
    %692 = vmatprep.subr.mxu0 0.0
    %693 = vmatpush1.msra.mxu0 %v66
    %694 = vmatprep.subr.mxu0 0.0
    %695 = vmatpush1.msra.mxu0 %v69
    %696 = vmatprep.subr.mxu0 0.0
    %697 = vmatpush1.msra.mxu0 %v72
    %698 = vmatprep.subr.mxu0 0.0
    %699 = vmatpush1.msra.mxu0 %v75
    %700 = vmatprep.subr.mxu0 0.0
    %701 = vmatpush1.msra.mxu0 %v78
    %702 = vmatprep.subr.mxu0 0.0
    %703 = vmatpush1.msra.mxu0 %v81
    %704 = vmatprep.subr.mxu0 0.0
    %705 = vmatpush1.msra.mxu0 %v84
    %706 = vmatprep.subr.mxu0 0.0
    %707 = vmatpush1.msra.mxu0 %v87
    %708 = vmatprep.subr.mxu0 0.0
    %709 = vmatpush1.msra.mxu0 %v90
    %710 = vmatprep.subr.mxu0 0.0
    %711 = vmatpush1.msra.mxu0 0.0
    %712 = vmatprep.subr.mxu0 0.0
    %713 = vmatpush1.msra.mxu0 0.0
    %714 = vmatprep.subr.mxu0 0.0
    %715 = vmatpush1.msra.mxu0 0.0
    %716 = vmatprep.subr.mxu0 0.0
    %717 = vmatpush1.msra.mxu0 0.0
    %718 = vmatprep.subr.mxu0 0.0
    %719 = vmatpush1.msra.mxu0 0.0
    %720 = vmatprep.subr.mxu0 0.0
    %721 = vmatpush1.msra.mxu0 0.0
    %722 = vmatprep.subr.mxu0 0.0
    %723 = vmatpush1.msra.mxu0 0.0
    %724 = vmatprep.subr.mxu0 0.0
    %725 = vmatpush1.msra.mxu0 0.0
    %726 = vmatprep.subr.mxu0 0.0
    %727 = vmatpush1.msra.mxu0 0.0
    %728 = vmatprep.subr.mxu0 0.0
    %729 = vmatpush1.msra.mxu0 0.0
    %730 = vmatprep.subr.mxu0 0.0
    %731 = vmatpush1.msra.mxu0 0.0
    %732 = vmatprep.subr.mxu0 0.0
    %733 = vmatpush1.msra.mxu0 0.0
    %734 = vmatprep.subr.mxu0 0.0
    %735 = vmatpush1.msra.mxu0 0.0
    %736 = vmatprep.subr.mxu0 0.0
    %737 = vmatpush1.msra.mxu0 0.0
    %738 = vmatprep.subr.mxu0 0.0
    %739 = vmatpush1.msra.mxu0 0.0
    %740 = vmatprep.subr.mxu0 0.0
    %741 = vmatpush1.msra.mxu0 0.0
    %742 = vmatprep.mubr.f32.mxu0 0.0
    %743 = vmatmul.mubr.f32.gmra.mrb[0].mxu0 %v600
    %v744 = vpop.f32.mrb[0].mxu0
    %v745 = vadd.f32 0.0, %v744
    %v746 = vpop.f32.mrb[0].mxu0
    %747 = vdwg.mxu0
    %v748 = vadd.f32 %v604, %v674
    %v749 = vxor.u32 %v748, 2147483648
    %v750 = vmul.f32 %v749, 1.442695
    %v751 = vpow.pop %v750
    %v752 = vadd.f32 %v751, 1.0
    %v753 = vrcp.pop %v752
    %v754 = vmul.f32 1.0, %v753
    %v755 = vadd.f32 %v605, %v676
    %v756 = vxor.u32 %v755, 2147483648
    %v757 = vmul.f32 %v756, 1.442695
    %v758 = vpow.pop %v757
    %v759 = vadd.f32 %v758, 1.0
    %v760 = vrcp.pop %v759
    %v761 = vmul.f32 1.0, %v760
    %v762 = vadd.f32 %v745, %v254
    %v763 = vmul.f32 %v754, %v762
    %v764 = vadd.f32 %v606, %v763
    %v765 = vtanh.pop %v764
    %v766 = vsub.f32 1.0, %v761
    %v767 = vmul.f32 %v766, %v765
    %v768 = vmul.f32 %v761, %v600
    %v769 = vadd.f32 %v767, %v768
    %s770 = scalar_lea.vmem [#allocation7], 24
    %771 = vst [vmem:[%s770] sm:$0xff] %v769
    %s772 = scalar_lea.vmem [#allocation2], 96
    %v773 = vld [vmem:[%s772] sm:$0xff]
    %v774 = vld [vmem:[%s772 + $0x8] sm:$0xff]
    %v775 = vld [vmem:[%s772 + $0x10] sm:$0xff]
    %776 = vmatprep.subr.mxu0 %v44
    %777 = vmatpush1.msra.mxu0 %v43
    %778 = vmatprep.subr.mxu0 %v47
    %779 = vmatpush1.msra.mxu0 %v46
    %780 = vmatprep.subr.mxu0 %v50
    %781 = vmatpush1.msra.mxu0 %v49
    %782 = vmatprep.subr.mxu0 %v53
    %783 = vmatpush1.msra.mxu0 %v52
    %784 = vmatprep.subr.mxu0 %v56
    %785 = vmatpush1.msra.mxu0 %v55
    %786 = vmatprep.subr.mxu0 %v59
    %787 = vmatpush1.msra.mxu0 %v58
    %788 = vmatprep.subr.mxu0 %v62
    %789 = vmatpush1.msra.mxu0 %v61
    %790 = vmatprep.subr.mxu0 %v65
    %791 = vmatpush1.msra.mxu0 %v64
    %792 = vmatprep.subr.mxu0 %v68
    %793 = vmatpush1.msra.mxu0 %v67
    %794 = vmatprep.subr.mxu0 %v71
    %795 = vmatpush1.msra.mxu0 %v70
    %796 = vmatprep.subr.mxu0 %v74
    %797 = vmatpush1.msra.mxu0 %v73
    %798 = vmatprep.subr.mxu0 %v77
    %799 = vmatpush1.msra.mxu0 %v76
    %800 = vmatprep.subr.mxu0 %v80
    %801 = vmatpush1.msra.mxu0 %v79
    %802 = vmatprep.subr.mxu0 %v83
    %803 = vmatpush1.msra.mxu0 %v82
    %804 = vmatprep.subr.mxu0 %v86
    %805 = vmatpush1.msra.mxu0 %v85
    %806 = vmatprep.subr.mxu0 %v89
    %807 = vmatpush1.msra.mxu0 %v88
    %808 = vmatprep.subr.mxu0 0.0
    %809 = vmatpush1.msra.mxu0 0.0
    %810 = vmatprep.subr.mxu0 0.0
    %811 = vmatpush1.msra.mxu0 0.0
    %812 = vmatprep.subr.mxu0 0.0
    %813 = vmatpush1.msra.mxu0 0.0
    %814 = vmatprep.subr.mxu0 0.0
    %815 = vmatpush1.msra.mxu0 0.0
    %816 = vmatprep.subr.mxu0 0.0
    %817 = vmatpush1.msra.mxu0 0.0
    %818 = vmatprep.subr.mxu0 0.0
    %819 = vmatpush1.msra.mxu0 0.0
    %820 = vmatprep.subr.mxu0 0.0
    %821 = vmatpush1.msra.mxu0 0.0
    %822 = vmatprep.subr.mxu0 0.0
    %823 = vmatpush1.msra.mxu0 0.0
    %824 = vmatprep.subr.mxu0 0.0
    %825 = vmatpush1.msra.mxu0 0.0
    %826 = vmatprep.subr.mxu0 0.0
    %827 = vmatpush1.msra.mxu0 0.0
    %828 = vmatprep.subr.mxu0 0.0
    %829 = vmatpush1.msra.mxu0 0.0
    %830 = vmatprep.subr.mxu0 0.0
    %831 = vmatpush1.msra.mxu0 0.0
    %832 = vmatprep.subr.mxu0 0.0
    %833 = vmatpush1.msra.mxu0 0.0
    %834 = vmatprep.subr.mxu0 0.0
    %835 = vmatpush1.msra.mxu0 0.0
    %836 = vmatprep.subr.mxu0 0.0
    %837 = vmatpush1.msra.mxu0 0.0
    %838 = vmatprep.subr.mxu0 0.0
    %839 = vmatpush1.msra.mxu0 0.0
    %840 = vmatprep.mubr.f32.mxu0 0.0
    %841 = vmatmul.mubr.f32.gmra.mrb[0].mxu0 %v769
    %v842 = vpop.f32.mrb[0].mxu0
    %v843 = vadd.f32 0.0, %v842
    %v844 = vpop.f32.mrb[0].mxu0
    %v845 = vadd.f32 0.0, %v844
    %846 = vdwg.mxu0
    %847 = vmatprep.subr.mxu0 0.0
    %848 = vmatpush1.msra.mxu0 %v45
    %849 = vmatprep.subr.mxu0 0.0
    %850 = vmatpush1.msra.mxu0 %v48
    %851 = vmatprep.subr.mxu0 0.0
    %852 = vmatpush1.msra.mxu0 %v51
    %853 = vmatprep.subr.mxu0 0.0
    %854 = vmatpush1.msra.mxu0 %v54
    %855 = vmatprep.subr.mxu0 0.0
    %856 = vmatpush1.msra.mxu0 %v57
    %857 = vmatprep.subr.mxu0 0.0
    %858 = vmatpush1.msra.mxu0 %v60
    %859 = vmatprep.subr.mxu0 0.0
    %860 = vmatpush1.msra.mxu0 %v63
    %861 = vmatprep.subr.mxu0 0.0
    %862 = vmatpush1.msra.mxu0 %v66
    %863 = vmatprep.subr.mxu0 0.0
    %864 = vmatpush1.msra.mxu0 %v69
    %865 = vmatprep.subr.mxu0 0.0
    %866 = vmatpush1.msra.mxu0 %v72
    %867 = vmatprep.subr.mxu0 0.0
    %868 = vmatpush1.msra.mxu0 %v75
    %869 = vmatprep.subr.mxu0 0.0
    %870 = vmatpush1.msra.mxu0 %v78
    %871 = vmatprep.subr.mxu0 0.0
    %872 = vmatpush1.msra.mxu0 %v81
    %873 = vmatprep.subr.mxu0 0.0
    %874 = vmatpush1.msra.mxu0 %v84
    %875 = vmatprep.subr.mxu0 0.0
    %876 = vmatpush1.msra.mxu0 %v87
    %877 = vmatprep.subr.mxu0 0.0
    %878 = vmatpush1.msra.mxu0 %v90
    %879 = vmatprep.subr.mxu0 0.0
    %880 = vmatpush1.msra.mxu0 0.0
    %881 = vmatprep.subr.mxu0 0.0
    %882 = vmatpush1.msra.mxu0 0.0
    %883 = vmatprep.subr.mxu0 0.0
    %884 = vmatpush1.msra.mxu0 0.0
    %885 = vmatprep.subr.mxu0 0.0
    %886 = vmatpush1.msra.mxu0 0.0
    %887 = vmatprep.subr.mxu0 0.0
    %888 = vmatpush1.msra.mxu0 0.0
    %889 = vmatprep.subr.mxu0 0.0
    %890 = vmatpush1.msra.mxu0 0.0
    %891 = vmatprep.subr.mxu0 0.0
    %892 = vmatpush1.msra.mxu0 0.0
    %893 = vmatprep.subr.mxu0 0.0
    %894 = vmatpush1.msra.mxu0 0.0
    %895 = vmatprep.subr.mxu0 0.0
    %896 = vmatpush1.msra.mxu0 0.0
    %897 = vmatprep.subr.mxu0 0.0
    %898 = vmatpush1.msra.mxu0 0.0
    %899 = vmatprep.subr.mxu0 0.0
    %900 = vmatpush1.msra.mxu0 0.0
    %901 = vmatprep.subr.mxu0 0.0
    %902 = vmatpush1.msra.mxu0 0.0
    %903 = vmatprep.subr.mxu0 0.0
    %904 = vmatpush1.msra.mxu0 0.0
    %905 = vmatprep.subr.mxu0 0.0
    %906 = vmatpush1.msra.mxu0 0.0
    %907 = vmatprep.subr.mxu0 0.0
    %908 = vmatpush1.msra.mxu0 0.0
    %909 = vmatprep.subr.mxu0 0.0
    %910 = vmatpush1.msra.mxu0 0.0
    %911 = vmatprep.mubr.f32.mxu0 0.0
    %912 = vmatmul.mubr.f32.gmra.mrb[0].mxu0 %v769
    %v913 = vpop.f32.mrb[0].mxu0
    %v914 = vadd.f32 0.0, %v913
    %v915 = vpop.f32.mrb[0].mxu0
    %916 = vdwg.mxu0
    %v917 = vadd.f32 %v773, %v843
    %v918 = vxor.u32 %v917, 2147483648
    %v919 = vmul.f32 %v918, 1.442695
    %v920 = vpow.pop %v919
    %v921 = vadd.f32 %v920, 1.0
    %v922 = vrcp.pop %v921
    %v923 = vmul.f32 1.0, %v922
    %v924 = vadd.f32 %v774, %v845
    %v925 = vxor.u32 %v924, 2147483648
    %v926 = vmul.f32 %v925, 1.442695
    %v927 = vpow.pop %v926
    %v928 = vadd.f32 %v927, 1.0
    %v929 = vrcp.pop %v928
    %v930 = vmul.f32 1.0, %v929
    %v931 = vadd.f32 %v914, %v254
    %v932 = vmul.f32 %v923, %v931
    %v933 = vadd.f32 %v775, %v932
    %v934 = vtanh.pop %v933
    %v935 = vsub.f32 1.0, %v930
    %v936 = vmul.f32 %v935, %v934
    %v937 = vmul.f32 %v930, %v769
    %v938 = vadd.f32 %v936, %v937
    %s939 = scalar_lea.vmem [#allocation7], 32
    %940 = vst [vmem:[%s939] sm:$0xff] %v938
    %s941 = scalar_lea.vmem [#allocation2], 120
    %v942 = vld [vmem:[%s941] sm:$0xff]
    %v943 = vld [vmem:[%s941 + $0x8] sm:$0xff]
    %v944 = vld [vmem:[%s941 + $0x10] sm:$0xff]
    %945 = vmatprep.subr.mxu0 %v44
    %946 = vmatpush1.msra.mxu0 %v43
    %947 = vmatprep.subr.mxu0 %v47
    %948 = vmatpush1.msra.mxu0 %v46
    %949 = vmatprep.subr.mxu0 %v50
    %950 = vmatpush1.msra.mxu0 %v49
    %951 = vmatprep.subr.mxu0 %v53
    %952 = vmatpush1.msra.mxu0 %v52
    %953 = vmatprep.subr.mxu0 %v56
    %954 = vmatpush1.msra.mxu0 %v55
    %955 = vmatprep.subr.mxu0 %v59
    %956 = vmatpush1.msra.mxu0 %v58
    %957 = vmatprep.subr.mxu0 %v62
    %958 = vmatpush1.msra.mxu0 %v61
    %959 = vmatprep.subr.mxu0 %v65
    %960 = vmatpush1.msra.mxu0 %v64
    %961 = vmatprep.subr.mxu0 %v68
    %962 = vmatpush1.msra.mxu0 %v67
    %963 = vmatprep.subr.mxu0 %v71
    %964 = vmatpush1.msra.mxu0 %v70
    %965 = vmatprep.subr.mxu0 %v74
    %966 = vmatpush1.msra.mxu0 %v73
    %967 = vmatprep.subr.mxu0 %v77
    %968 = vmatpush1.msra.mxu0 %v76
    %969 = vmatprep.subr.mxu0 %v80
    %970 = vmatpush1.msra.mxu0 %v79
    %971 = vmatprep.subr.mxu0 %v83
    %972 = vmatpush1.msra.mxu0 %v82
    %973 = vmatprep.subr.mxu0 %v86
    %974 = vmatpush1.msra.mxu0 %v85
    %975 = vmatprep.subr.mxu0 %v89
    %976 = vmatpush1.msra.mxu0 %v88
    %977 = vmatprep.subr.mxu0 0.0
    %978 = vmatpush1.msra.mxu0 0.0
    %979 = vmatprep.subr.mxu0 0.0
    %980 = vmatpush1.msra.mxu0 0.0
    %981 = vmatprep.subr.mxu0 0.0
    %982 = vmatpush1.msra.mxu0 0.0
    %983 = vmatprep.subr.mxu0 0.0
    %984 = vmatpush1.msra.mxu0 0.0
    %985 = vmatprep.subr.mxu0 0.0
    %986 = vmatpush1.msra.mxu0 0.0
    %987 = vmatprep.subr.mxu0 0.0
    %988 = vmatpush1.msra.mxu0 0.0
    %989 = vmatprep.subr.mxu0 0.0
    %990 = vmatpush1.msra.mxu0 0.0
    %991 = vmatprep.subr.mxu0 0.0
    %992 = vmatpush1.msra.mxu0 0.0
    %993 = vmatprep.subr.mxu0 0.0
    %994 = vmatpush1.msra.mxu0 0.0
    %995 = vmatprep.subr.mxu0 0.0
    %996 = vmatpush1.msra.mxu0 0.0
    %997 = vmatprep.subr.mxu0 0.0
    %998 = vmatpush1.msra.mxu0 0.0
    %999 = vmatprep.subr.mxu0 0.0
    %1000 = vmatpush1.msra.mxu0 0.0
    %1001 = vmatprep.subr.mxu0 0.0
    %1002 = vmatpush1.msra.mxu0 0.0
    %1003 = vmatprep.subr.mxu0 0.0
    %1004 = vmatpush1.msra.mxu0 0.0
    %1005 = vmatprep.subr.mxu0 0.0
    %1006 = vmatpush1.msra.mxu0 0.0
    %1007 = vmatprep.subr.mxu0 0.0
    %1008 = vmatpush1.msra.mxu0 0.0
    %1009 = vmatprep.mubr.f32.mxu0 0.0
    %1010 = vmatmul.mubr.f32.gmra.mrb[0].mxu0 %v938
    %v1011 = vpop.f32.mrb[0].mxu0
    %v1012 = vadd.f32 0.0, %v1011
    %v1013 = vpop.f32.mrb[0].mxu0
    %v1014 = vadd.f32 0.0, %v1013
    %1015 = vdwg.mxu0
    %1016 = vmatprep.subr.mxu0 0.0
    %1017 = vmatpush1.msra.mxu0 %v45
    %1018 = vmatprep.subr.mxu0 0.0
    %1019 = vmatpush1.msra.mxu0 %v48
    %1020 = vmatprep.subr.mxu0 0.0
    %1021 = vmatpush1.msra.mxu0 %v51
    %1022 = vmatprep.subr.mxu0 0.0
    %1023 = vmatpush1.msra.mxu0 %v54
    %1024 = vmatprep.subr.mxu0 0.0
    %1025 = vmatpush1.msra.mxu0 %v57
    %1026 = vmatprep.subr.mxu0 0.0
    %1027 = vmatpush1.msra.mxu0 %v60
    %1028 = vmatprep.subr.mxu0 0.0
    %1029 = vmatpush1.msra.mxu0 %v63
    %1030 = vmatprep.subr.mxu0 0.0
    %1031 = vmatpush1.msra.mxu0 %v66
    %1032 = vmatprep.subr.mxu0 0.0
    %1033 = vmatpush1.msra.mxu0 %v69
    %1034 = vmatprep.subr.mxu0 0.0
    %1035 = vmatpush1.msra.mxu0 %v72
    %1036 = vmatprep.subr.mxu0 0.0
    %1037 = vmatpush1.msra.mxu0 %v75
    %1038 = vmatprep.subr.mxu0 0.0
    %1039 = vmatpush1.msra.mxu0 %v78
    %1040 = vmatprep.subr.mxu0 0.0
    %1041 = vmatpush1.msra.mxu0 %v81
    %1042 = vmatprep.subr.mxu0 0.0
    %1043 = vmatpush1.msra.mxu0 %v84
    %1044 = vmatprep.subr.mxu0 0.0
    %1045 = vmatpush1.msra.mxu0 %v87
    %1046 = vmatprep.subr.mxu0 0.0
    %1047 = vmatpush1.msra.mxu0 %v90
    %1048 = vmatprep.subr.mxu0 0.0
    %1049 = vmatpush1.msra.mxu0 0.0
    %1050 = vmatprep.subr.mxu0 0.0
    %1051 = vmatpush1.msra.mxu0 0.0
    %1052 = vmatprep.subr.mxu0 0.0
    %1053 = vmatpush1.msra.mxu0 0.0
    %1054 = vmatprep.subr.mxu0 0.0
    %1055 = vmatpush1.msra.mxu0 0.0
    %1056 = vmatprep.subr.mxu0 0.0
    %1057 = vmatpush1.msra.mxu0 0.0
    %1058 = vmatprep.subr.mxu0 0.0
    %1059 = vmatpush1.msra.mxu0 0.0
    %1060 = vmatprep.subr.mxu0 0.0
    %1061 = vmatpush1.msra.mxu0 0.0
    %1062 = vmatprep.subr.mxu0 0.0
    %1063 = vmatpush1.msra.mxu0 0.0
    %1064 = vmatprep.subr.mxu0 0.0
    %1065 = vmatpush1.msra.mxu0 0.0
    %1066 = vmatprep.subr.mxu0 0.0
    %1067 = vmatpush1.msra.mxu0 0.0
    %1068 = vmatprep.subr.mxu0 0.0
    %1069 = vmatpush1.msra.mxu0 0.0
    %1070 = vmatprep.subr.mxu0 0.0
    %1071 = vmatpush1.msra.mxu0 0.0
    %1072 = vmatprep.subr.mxu0 0.0
    %1073 = vmatpush1.msra.mxu0 0.0
    %1074 = vmatprep.subr.mxu0 0.0
    %1075 = vmatpush1.msra.mxu0 0.0
    %1076 = vmatprep.subr.mxu0 0.0
    %1077 = vmatpush1.msra.mxu0 0.0
    %1078 = vmatprep.subr.mxu0 0.0
    %1079 = vmatpush1.msra.mxu0 0.0
    %1080 = vmatprep.mubr.f32.mxu0 0.0
    %1081 = vmatmul.mubr.f32.gmra.mrb[0].mxu0 %v938
    %v1082 = vpop.f32.mrb[0].mxu0
    %v1083 = vadd.f32 0.0, %v1082
    %v1084 = vpop.f32.mrb[0].mxu0
    %1085 = vdwg.mxu0
    %v1086 = vadd.f32 %v942, %v1012
    %v1087 = vxor.u32 %v1086, 2147483648
    %v1088 = vmul.f32 %v1087, 1.442695
    %v1089 = vpow.pop %v1088
    %v1090 = vadd.f32 %v1089, 1.0
    %v1091 = vrcp.pop %v1090
    %v1092 = vmul.f32 1.0, %v1091
    %v1093 = vadd.f32 %v943, %v1014
    %v1094 = vxor.u32 %v1093, 2147483648
    %v1095 = vmul.f32 %v1094, 1.442695
    %v1096 = vpow.pop %v1095
    %v1097 = vadd.f32 %v1096, 1.0
    %v1098 = vrcp.pop %v1097
    %v1099 = vmul.f32 1.0, %v1098
    %v1100 = vadd.f32 %v1083, %v254
    %v1101 = vmul.f32 %v1092, %v1100
    %v1102 = vadd.f32 %v944, %v1101
    %v1103 = vtanh.pop %v1102
    %v1104 = vsub.f32 1.0, %v1099
    %v1105 = vmul.f32 %v1104, %v1103
    %v1106 = vmul.f32 %v1099, %v938
    %v1107 = vadd.f32 %v1105, %v1106
    %s1108 = scalar_lea.vmem [#allocation7], 40
    %1109 = vst [vmem:[%s1108] sm:$0xff] %v1107
    %s1110 = scalar_lea.vmem [#allocation2], 144
    %v1111 = vld [vmem:[%s1110] sm:$0xff]
    %v1112 = vld [vmem:[%s1110 + $0x8] sm:$0xff]
    %v1113 = vld [vmem:[%s1110 + $0x10] sm:$0xff]
    %1114 = vmatprep.subr.mxu0 %v44
    %1115 = vmatpush1.msra.mxu0 %v43
    %1116 = vmatprep.subr.mxu0 %v47
    %1117 = vmatpush1.msra.mxu0 %v46
    %1118 = vmatprep.subr.mxu0 %v50
    %1119 = vmatpush1.msra.mxu0 %v49
    %1120 = vmatprep.subr.mxu0 %v53
    %1121 = vmatpush1.msra.mxu0 %v52
    %1122 = vmatprep.subr.mxu0 %v56
    %1123 = vmatpush1.msra.mxu0 %v55
    %1124 = vmatprep.subr.mxu0 %v59
    %1125 = vmatpush1.msra.mxu0 %v58
    %1126 = vmatprep.subr.mxu0 %v62
    %1127 = vmatpush1.msra.mxu0 %v61
    %1128 = vmatprep.subr.mxu0 %v65
    %1129 = vmatpush1.msra.mxu0 %v64
    %1130 = vmatprep.subr.mxu0 %v68
    %1131 = vmatpush1.msra.mxu0 %v67
    %1132 = vmatprep.subr.mxu0 %v71
    %1133 = vmatpush1.msra.mxu0 %v70
    %1134 = vmatprep.subr.mxu0 %v74
    %1135 = vmatpush1.msra.mxu0 %v73
    %1136 = vmatprep.subr.mxu0 %v77
    %1137 = vmatpush1.msra.mxu0 %v76
    %1138 = vmatprep.subr.mxu0 %v80
    %1139 = vmatpush1.msra.mxu0 %v79
    %1140 = vmatprep.subr.mxu0 %v83
    %1141 = vmatpush1.msra.mxu0 %v82
    %1142 = vmatprep.subr.mxu0 %v86
    %1143 = vmatpush1.msra.mxu0 %v85
    %1144 = vmatprep.subr.mxu0 %v89
    %1145 = vmatpush1.msra.mxu0 %v88
    %1146 = vmatprep.subr.mxu0 0.0
    %1147 = vmatpush1.msra.mxu0 0.0
    %1148 = vmatprep.subr.mxu0 0.0
    %1149 = vmatpush1.msra.mxu0 0.0
    %1150 = vmatprep.subr.mxu0 0.0
    %1151 = vmatpush1.msra.mxu0 0.0
    %1152 = vmatprep.subr.mxu0 0.0
    %1153 = vmatpush1.msra.mxu0 0.0
    %1154 = vmatprep.subr.mxu0 0.0
    %1155 = vmatpush1.msra.mxu0 0.0
    %1156 = vmatprep.subr.mxu0 0.0
    %1157 = vmatpush1.msra.mxu0 0.0
    %1158 = vmatprep.subr.mxu0 0.0
    %1159 = vmatpush1.msra.mxu0 0.0
    %1160 = vmatprep.subr.mxu0 0.0
    %1161 = vmatpush1.msra.mxu0 0.0
    %1162 = vmatprep.subr.mxu0 0.0
    %1163 = vmatpush1.msra.mxu0 0.0
    %1164 = vmatprep.subr.mxu0 0.0
    %1165 = vmatpush1.msra.mxu0 0.0
    %1166 = vmatprep.subr.mxu0 0.0
    %1167 = vmatpush1.msra.mxu0 0.0
    %1168 = vmatprep.subr.mxu0 0.0
    %1169 = vmatpush1.msra.mxu0 0.0
    %1170 = vmatprep.subr.mxu0 0.0
    %1171 = vmatpush1.msra.mxu0 0.0
    %1172 = vmatprep.subr.mxu0 0.0
    %1173 = vmatpush1.msra.mxu0 0.0
    %1174 = vmatprep.subr.mxu0 0.0
    %1175 = vmatpush1.msra.mxu0 0.0
    %1176 = vmatprep.subr.mxu0 0.0
    %1177 = vmatpush1.msra.mxu0 0.0
    %1178 = vmatprep.mubr.f32.mxu0 0.0
    %1179 = vmatmul.mubr.f32.gmra.mrb[0].mxu0 %v1107
    %v1180 = vpop.f32.mrb[0].mxu0
    %v1181 = vadd.f32 0.0, %v1180
    %v1182 = vpop.f32.mrb[0].mxu0
    %v1183 = vadd.f32 0.0, %v1182
    %1184 = vdwg.mxu0
    %1185 = vmatprep.subr.mxu0 0.0
    %1186 = vmatpush1.msra.mxu0 %v45
    %1187 = vmatprep.subr.mxu0 0.0
    %1188 = vmatpush1.msra.mxu0 %v48
    %1189 = vmatprep.subr.mxu0 0.0
    %1190 = vmatpush1.msra.mxu0 %v51
    %1191 = vmatprep.subr.mxu0 0.0
    %1192 = vmatpush1.msra.mxu0 %v54
    %1193 = vmatprep.subr.mxu0 0.0
    %1194 = vmatpush1.msra.mxu0 %v57
    %1195 = vmatprep.subr.mxu0 0.0
    %1196 = vmatpush1.msra.mxu0 %v60
    %1197 = vmatprep.subr.mxu0 0.0
    %1198 = vmatpush1.msra.mxu0 %v63
    %1199 = vmatprep.subr.mxu0 0.0
    %1200 = vmatpush1.msra.mxu0 %v66
    %1201 = vmatprep.subr.mxu0 0.0
    %1202 = vmatpush1.msra.mxu0 %v69
    %1203 = vmatprep.subr.mxu0 0.0
    %1204 = vmatpush1.msra.mxu0 %v72
    %1205 = vmatprep.subr.mxu0 0.0
    %1206 = vmatpush1.msra.mxu0 %v75
    %1207 = vmatprep.subr.mxu0 0.0
    %1208 = vmatpush1.msra.mxu0 %v78
    %1209 = vmatprep.subr.mxu0 0.0
    %1210 = vmatpush1.msra.mxu0 %v81
    %1211 = vmatprep.subr.mxu0 0.0
    %1212 = vmatpush1.msra.mxu0 %v84
    %1213 = vmatprep.subr.mxu0 0.0
    %1214 = vmatpush1.msra.mxu0 %v87
    %1215 = vmatprep.subr.mxu0 0.0
    %1216 = vmatpush1.msra.mxu0 %v90
    %1217 = vmatprep.subr.mxu0 0.0
    %1218 = vmatpush1.msra.mxu0 0.0
    %1219 = vmatprep.subr.mxu0 0.0
    %1220 = vmatpush1.msra.mxu0 0.0
    %1221 = vmatprep.subr.mxu0 0.0
    %1222 = vmatpush1.msra.mxu0 0.0
    %1223 = vmatprep.subr.mxu0 0.0
    %1224 = vmatpush1.msra.mxu0 0.0
    %1225 = vmatprep.subr.mxu0 0.0
    %1226 = vmatpush1.msra.mxu0 0.0
    %1227 = vmatprep.subr.mxu0 0.0
    %1228 = vmatpush1.msra.mxu0 0.0
    %1229 = vmatprep.subr.mxu0 0.0
    %1230 = vmatpush1.msra.mxu0 0.0
    %1231 = vmatprep.subr.mxu0 0.0
    %1232 = vmatpush1.msra.mxu0 0.0
    %1233 = vmatprep.subr.mxu0 0.0
    %1234 = vmatpush1.msra.mxu0 0.0
    %1235 = vmatprep.subr.mxu0 0.0
    %1236 = vmatpush1.msra.mxu0 0.0
    %1237 = vmatprep.subr.mxu0 0.0
    %1238 = vmatpush1.msra.mxu0 0.0
    %1239 = vmatprep.subr.mxu0 0.0
    %1240 = vmatpush1.msra.mxu0 0.0
    %1241 = vmatprep.subr.mxu0 0.0
    %1242 = vmatpush1.msra.mxu0 0.0
    %1243 = vmatprep.subr.mxu0 0.0
    %1244 = vmatpush1.msra.mxu0 0.0
    %1245 = vmatprep.subr.mxu0 0.0
    %1246 = vmatpush1.msra.mxu0 0.0
    %1247 = vmatprep.subr.mxu0 0.0
    %1248 = vmatpush1.msra.mxu0 0.0
    %1249 = vmatprep.mubr.f32.mxu0 0.0
    %1250 = vmatmul.mubr.f32.gmra.mrb[0].mxu0 %v1107
    %v1251 = vpop.f32.mrb[0].mxu0
    %v1252 = vadd.f32 0.0, %v1251
    %v1253 = vpop.f32.mrb[0].mxu0
    %1254 = vdwg.mxu0
    %v1255 = vadd.f32 %v1111, %v1181
    %v1256 = vxor.u32 %v1255, 2147483648
    %v1257 = vmul.f32 %v1256, 1.442695
    %v1258 = vpow.pop %v1257
    %v1259 = vadd.f32 %v1258, 1.0
    %v1260 = vrcp.pop %v1259
    %v1261 = vmul.f32 1.0, %v1260
    %v1262 = vadd.f32 %v1112, %v1183
    %v1263 = vxor.u32 %v1262, 2147483648
    %v1264 = vmul.f32 %v1263, 1.442695
    %v1265 = vpow.pop %v1264
    %v1266 = vadd.f32 %v1265, 1.0
    %v1267 = vrcp.pop %v1266
    %v1268 = vmul.f32 1.0, %v1267
    %v1269 = vadd.f32 %v1252, %v254
    %v1270 = vmul.f32 %v1261, %v1269
    %v1271 = vadd.f32 %v1113, %v1270
    %v1272 = vtanh.pop %v1271
    %v1273 = vsub.f32 1.0, %v1268
    %v1274 = vmul.f32 %v1273, %v1272
    %v1275 = vmul.f32 %v1268, %v1107
    %v1276 = vadd.f32 %v1274, %v1275
    %s1277 = scalar_lea.vmem [#allocation7], 48
    %1278 = vst [vmem:[%s1277] sm:$0xff] %v1276
    %s1279 = scalar_lea.vmem [#allocation2], 168
    %v1280 = vld [vmem:[%s1279] sm:$0xff]
    %v1281 = vld [vmem:[%s1279 + $0x8] sm:$0xff]
    %v1282 = vld [vmem:[%s1279 + $0x10] sm:$0xff]
    %1283 = vmatprep.subr.mxu0 %v44
    %1284 = vmatpush1.msra.mxu0 %v43
    %1285 = vmatprep.subr.mxu0 %v47
    %1286 = vmatpush1.msra.mxu0 %v46
    %1287 = vmatprep.subr.mxu0 %v50
    %1288 = vmatpush1.msra.mxu0 %v49
    %1289 = vmatprep.subr.mxu0 %v53
    %1290 = vmatpush1.msra.mxu0 %v52
    %1291 = vmatprep.subr.mxu0 %v56
    %1292 = vmatpush1.msra.mxu0 %v55
    %1293 = vmatprep.subr.mxu0 %v59
    %1294 = vmatpush1.msra.mxu0 %v58
    %1295 = vmatprep.subr.mxu0 %v62
    %1296 = vmatpush1.msra.mxu0 %v61
    %1297 = vmatprep.subr.mxu0 %v65
    %1298 = vmatpush1.msra.mxu0 %v64
    %1299 = vmatprep.subr.mxu0 %v68
    %1300 = vmatpush1.msra.mxu0 %v67
    %1301 = vmatprep.subr.mxu0 %v71
    %1302 = vmatpush1.msra.mxu0 %v70
    %1303 = vmatprep.subr.mxu0 %v74
    %1304 = vmatpush1.msra.mxu0 %v73
    %1305 = vmatprep.subr.mxu0 %v77
    %1306 = vmatpush1.msra.mxu0 %v76
    %1307 = vmatprep.subr.mxu0 %v80
    %1308 = vmatpush1.msra.mxu0 %v79
    %1309 = vmatprep.subr.mxu0 %v83
    %1310 = vmatpush1.msra.mxu0 %v82
    %1311 = vmatprep.subr.mxu0 %v86
    %1312 = vmatpush1.msra.mxu0 %v85
    %1313 = vmatprep.subr.mxu0 %v89
    %1314 = vmatpush1.msra.mxu0 %v88
    %1315 = vmatprep.subr.mxu0 0.0
    %1316 = vmatpush1.msra.mxu0 0.0
    %1317 = vmatprep.subr.mxu0 0.0
    %1318 = vmatpush1.msra.mxu0 0.0
    %1319 = vmatprep.subr.mxu0 0.0
    %1320 = vmatpush1.msra.mxu0 0.0
    %1321 = vmatprep.subr.mxu0 0.0
    %1322 = vmatpush1.msra.mxu0 0.0
    %1323 = vmatprep.subr.mxu0 0.0
    %1324 = vmatpush1.msra.mxu0 0.0
    %1325 = vmatprep.subr.mxu0 0.0
    %1326 = vmatpush1.msra.mxu0 0.0
    %1327 = vmatprep.subr.mxu0 0.0
    %1328 = vmatpush1.msra.mxu0 0.0
    %1329 = vmatprep.subr.mxu0 0.0
    %1330 = vmatpush1.msra.mxu0 0.0
    %1331 = vmatprep.subr.mxu0 0.0
    %1332 = vmatpush1.msra.mxu0 0.0
    %1333 = vmatprep.subr.mxu0 0.0
    %1334 = vmatpush1.msra.mxu0 0.0
    %1335 = vmatprep.subr.mxu0 0.0
    %1336 = vmatpush1.msra.mxu0 0.0
    %1337 = vmatprep.subr.mxu0 0.0
    %1338 = vmatpush1.msra.mxu0 0.0
    %1339 = vmatprep.subr.mxu0 0.0
    %1340 = vmatpush1.msra.mxu0 0.0
    %1341 = vmatprep.subr.mxu0 0.0
    %1342 = vmatpush1.msra.mxu0 0.0
    %1343 = vmatprep.subr.mxu0 0.0
    %1344 = vmatpush1.msra.mxu0 0.0
    %1345 = vmatprep.subr.mxu0 0.0
    %1346 = vmatpush1.msra.mxu0 0.0
    %1347 = vmatprep.mubr.f32.mxu0 0.0
    %1348 = vmatmul.mubr.f32.gmra.mrb[0].mxu0 %v1276
    %v1349 = vpop.f32.mrb[0].mxu0
    %v1350 = vadd.f32 0.0, %v1349
    %v1351 = vpop.f32.mrb[0].mxu0
    %v1352 = vadd.f32 0.0, %v1351
    %1353 = vdwg.mxu0
    %1354 = vmatprep.subr.mxu0 0.0
    %1355 = vmatpush1.msra.mxu0 %v45
    %1356 = vmatprep.subr.mxu0 0.0
    %1357 = vmatpush1.msra.mxu0 %v48
    %1358 = vmatprep.subr.mxu0 0.0
    %1359 = vmatpush1.msra.mxu0 %v51
    %1360 = vmatprep.subr.mxu0 0.0
    %1361 = vmatpush1.msra.mxu0 %v54
    %1362 = vmatprep.subr.mxu0 0.0
    %1363 = vmatpush1.msra.mxu0 %v57
    %1364 = vmatprep.subr.mxu0 0.0
    %1365 = vmatpush1.msra.mxu0 %v60
    %1366 = vmatprep.subr.mxu0 0.0
    %1367 = vmatpush1.msra.mxu0 %v63
    %1368 = vmatprep.subr.mxu0 0.0
    %1369 = vmatpush1.msra.mxu0 %v66
    %1370 = vmatprep.subr.mxu0 0.0
    %1371 = vmatpush1.msra.mxu0 %v69
    %1372 = vmatprep.subr.mxu0 0.0
    %1373 = vmatpush1.msra.mxu0 %v72
    %1374 = vmatprep.subr.mxu0 0.0
    %1375 = vmatpush1.msra.mxu0 %v75
    %1376 = vmatprep.subr.mxu0 0.0
    %1377 = vmatpush1.msra.mxu0 %v78
    %1378 = vmatprep.subr.mxu0 0.0
    %1379 = vmatpush1.msra.mxu0 %v81
    %1380 = vmatprep.subr.mxu0 0.0
    %1381 = vmatpush1.msra.mxu0 %v84
    %1382 = vmatprep.subr.mxu0 0.0
    %1383 = vmatpush1.msra.mxu0 %v87
    %1384 = vmatprep.subr.mxu0 0.0
    %1385 = vmatpush1.msra.mxu0 %v90
    %1386 = vmatprep.subr.mxu0 0.0
    %1387 = vmatpush1.msra.mxu0 0.0
    %1388 = vmatprep.subr.mxu0 0.0
    %1389 = vmatpush1.msra.mxu0 0.0
    %1390 = vmatprep.subr.mxu0 0.0
    %1391 = vmatpush1.msra.mxu0 0.0
    %1392 = vmatprep.subr.mxu0 0.0
    %1393 = vmatpush1.msra.mxu0 0.0
    %1394 = vmatprep.subr.mxu0 0.0
    %1395 = vmatpush1.msra.mxu0 0.0
    %1396 = vmatprep.subr.mxu0 0.0
    %1397 = vmatpush1.msra.mxu0 0.0
    %1398 = vmatprep.subr.mxu0 0.0
    %1399 = vmatpush1.msra.mxu0 0.0
    %1400 = vmatprep.subr.mxu0 0.0
    %1401 = vmatpush1.msra.mxu0 0.0
    %1402 = vmatprep.subr.mxu0 0.0
    %1403 = vmatpush1.msra.mxu0 0.0
    %1404 = vmatprep.subr.mxu0 0.0
    %1405 = vmatpush1.msra.mxu0 0.0
    %1406 = vmatprep.subr.mxu0 0.0
    %1407 = vmatpush1.msra.mxu0 0.0
    %1408 = vmatprep.subr.mxu0 0.0
    %1409 = vmatpush1.msra.mxu0 0.0
    %1410 = vmatprep.subr.mxu0 0.0
    %1411 = vmatpush1.msra.mxu0 0.0
    %1412 = vmatprep.subr.mxu0 0.0
    %1413 = vmatpush1.msra.mxu0 0.0
    %1414 = vmatprep.subr.mxu0 0.0
    %1415 = vmatpush1.msra.mxu0 0.0
    %1416 = vmatprep.subr.mxu0 0.0
    %1417 = vmatpush1.msra.mxu0 0.0
    %1418 = vmatprep.mubr.f32.mxu0 0.0
    %1419 = vmatmul.mubr.f32.gmra.mrb[0].mxu0 %v1276
    %v1420 = vpop.f32.mrb[0].mxu0
    %v1421 = vadd.f32 0.0, %v1420
    %v1422 = vpop.f32.mrb[0].mxu0
    %1423 = vdwg.mxu0
    %v1424 = vadd.f32 %v1280, %v1350
    %v1425 = vxor.u32 %v1424, 2147483648
    %v1426 = vmul.f32 %v1425, 1.442695
    %v1427 = vpow.pop %v1426
    %v1428 = vadd.f32 %v1427, 1.0
    %v1429 = vrcp.pop %v1428
    %v1430 = vmul.f32 1.0, %v1429
    %v1431 = vadd.f32 %v1281, %v1352
    %v1432 = vxor.u32 %v1431, 2147483648
    %v1433 = vmul.f32 %v1432, 1.442695
    %v1434 = vpow.pop %v1433
    %v1435 = vadd.f32 %v1434, 1.0
    %v1436 = vrcp.pop %v1435
    %v1437 = vmul.f32 1.0, %v1436
    %v1438 = vadd.f32 %v1421, %v254
    %v1439 = vmul.f32 %v1430, %v1438
    %v1440 = vadd.f32 %v1282, %v1439
    %v1441 = vtanh.pop %v1440
    %v1442 = vsub.f32 1.0, %v1437
    %v1443 = vmul.f32 %v1442, %v1441
    %v1444 = vmul.f32 %v1437, %v1276
    %v1445 = vadd.f32 %v1443, %v1444
    %s1446 = scalar_lea.vmem [#allocation7], 56
    %1447 = vst [vmem:[%s1446] sm:$0xff] %v1445
    // Predicated region
    $region22: #{tpu_custom_call.1} parent=1 // pred_check
      _
    $region23: #{tpu_custom_call.1} parent=1 // pred_check_branch
      %1449 = sbr.rel (0) target = $region25
    $region24: #{tpu_custom_call.1} parent=1 // pred_region
      %s1451 = ssub.s32 1024, 1024
      %1452 = vsyncadd [#allocation4], %s1451
      %s1453 = sshll.u32 [#allocation7], 4
      %s1454 = int_to_ptr.vmem [resolvable:$true] %s1453
      %1459 = dma.vmem_to_hbm [thread:$0]  %s1454, 1024, %s3, [#allocation4], 128, 128, 8
    $region25: #{tpu_custom_call.1} parent=1 // pred_fallthru
      _
    // Predicated region
    $region26: #{tpu_custom_call.1} parent=1 // pred_check
      _
    $region27: #{tpu_custom_call.1} parent=1 // pred_check_branch
      %1461 = sbr.rel (0) target = $region29
    $region28: #{tpu_custom_call.1} parent=1 // pred_region
      %1462 = dma.done [#allocation4], 1024
    $region29: #{tpu_custom_call.1} parent=1 // pred_fallthru
      _
    %1463 = vsyncpa [#allocation3], 1
    %1464 = vsyncpa [#allocation6], 1
    %1465 = vsyncpa [#allocation4], 1

</llo_original>
